<compile_context>
chip_gen: v5e
topology: v5e:2x2
jax: 0.10.0
libtpu: 0.0.40
codegen_flags: <defaults>
</compile_context>

<pallas_src>
import math
from functools import partial

import jax
import jax.numpy as jnp
from jax.experimental import pallas as pl
from jax.experimental.pallas import tpu as pltpu

NEG_SLOPE = 0.2       # GATConv default negative_slope
NEG_INF = -1e30       # mask value (valid: every row has a self-loop)
LANE_PAD = 128        # layer-2 channel dim padded to one full lane tile


def fused_gat_kernel(x_ref, adj_ref, w1_ref, asrc1_ref, adst1_ref, b1_ref,
                     w2_ref, asrc2_ref, adst2_ref, b2_ref, out_ref):
    """Fused 2-layer GAT forward.

    Refs (in order):
      x_ref     [N, F]        bf16  node features
      adj_ref   [N, N]        int8  adj[i, j] = 1 iff message edge j -> i
      w1_ref    [H1, F, C1]   bf16  layer-1 weight, head-major
      asrc1_ref [H1, 1, C1]   f32   layer-1 att_src
      adst1_ref [H1, 1, C1]   f32   layer-1 att_dst
      b1_ref    [H1, 1, C1]   f32   layer-1 bias
      w2_ref    [H1, C1, P]   f bf16 layer-2 weight (C2 cols zero-padded to P)
      asrc2_ref [1, P]        f32   layer-2 att_src (zero-padded)
      adst2_ref [1, P]        f32   layer-2 att_dst (zero-padded)
      b2_ref    [1, P]        f32   layer-2 bias    (zero-padded)
      out_ref   [N, P]        f32   final output (caller slices [:, :C2])
    """
    f32, bf16 = jnp.float32, jnp.bfloat16
    H1 = w1_ref.shape[0]
    N, F_in = x_ref.shape

    # 0/1 edge mask (int8 -> f32 cast, one tiny tile).  At scale, recompute
    # the compare per row-tile instead of pinning anything across layers.
    edge = adj_ref[...].astype(f32) > 0.5                      # [N, N] bool

    # ---------- layer 1: GATConv(F -> C1, heads=H1, concat) -- all heads batched
    xb = jnp.broadcast_to(x_ref[...][None, :, :], (H1, N, F_in))        # bf16
    h1 = jnp.einsum('hnf,hfc->hnc', xb, w1_ref[...],
                    preferred_element_type=f32)                # [H1, N, C1]
    e_src = jnp.sum(h1 * asrc1_ref[...], axis=-1)              # [H1, N] (source j)
    e_dst = jnp.sum(h1 * adst1_ref[...], axis=-1)              # [H1, N] (target i)

    s = e_dst[:, :, None] + e_src[:, None, :]                  # [H1, N, N]
    s = jnp.where(s >= 0.0, s, f32(NEG_SLOPE) * s)             # LeakyReLU
    s = jnp.where(edge, s, f32(NEG_INF))                       # mask non-edges
    s = s - jnp.max(s, axis=-1, keepdims=True)
    p = jnp.exp(s)                                             # masked -> 0
    r = jnp.sum(p, axis=-1, keepdims=True)                     # [H1, N, 1]

    o = jnp.einsum('hij,hjc->hic', p.astype(bf16), h1.astype(bf16),
                   preferred_element_type=f32)                 # [H1, N, C1]
    h1a = o * pl.reciprocal(r, approx=True) + b1_ref[...]      # bias (EUP divide)
    # F.elu -- exp argument clamped so the discarded branch never hits inf.
    h1a = jnp.where(h1a > 0.0, h1a, jnp.exp(jnp.minimum(h1a, 0.0)) - 1.0)

    # ---------- layer 2: GATConv(H1*C1 -> C2, heads=1) -- channels lane-padded
    h2 = jnp.sum(
        jnp.einsum('hnc,hcm->hnm', h1a.astype(bf16), w2_ref[...],
                   preferred_element_type=f32),
        axis=0)                                                # [N, P]
    e_dst2 = jnp.sum(h2 * adst2_ref[...], axis=-1, keepdims=True)   # [N, 1]
    e_src2 = jnp.sum(h2 * asrc2_ref[...], axis=-1, keepdims=True)   # [N, 1]

    s2 = e_dst2 + e_src2.T                                     # [N, N]
    s2 = jnp.where(s2 >= 0.0, s2, f32(NEG_SLOPE) * s2)
    s2 = jnp.where(edge, s2, f32(NEG_INF))
    s2 = s2 - jnp.max(s2, axis=-1, keepdims=True)
    p2 = jnp.exp(s2)
    r2 = jnp.sum(p2, axis=-1, keepdims=True)                   # [N, 1]

    o2 = jnp.dot(p2.astype(bf16), h2.astype(bf16),
                 preferred_element_type=f32)                   # [N, P] lane-dense
    out_ref[...] = (o2 * pl.reciprocal(r2, approx=True)
                    + b2_ref[...]).astype(out_ref.dtype)


def prepare_gat_inputs(x, adj, params, *, heads1=8, c1=8, pad=LANE_PAD):
    """One-time parameter re-layout / padding / dtype casts (hoisted out of
    the per-call path).  Returns (kernel_inputs_tuple, n_out)."""
    n, f_in = x.shape
    c2 = params["W2"].shape[1]
    assert c2 <= pad

    w1h = (params["W1"].reshape(f_in, heads1, c1)
           .transpose(1, 0, 2).astype(jnp.bfloat16))                 # [H, F, C1]
    asrc1 = params["as1"].reshape(heads1, 1, c1).astype(jnp.float32)
    adst1 = params["ad1"].reshape(heads1, 1, c1).astype(jnp.float32)
    b1 = params["b1"].reshape(heads1, 1, c1).astype(jnp.float32)

    w2h = (jnp.zeros((heads1, c1, pad), jnp.float32)
           .at[:, :, :c2].set(params["W2"].reshape(heads1, c1, c2))
           .astype(jnp.bfloat16))                                     # [H, C1, P]
    asrc2 = jnp.zeros((1, pad), jnp.float32).at[:, :c2].set(
        params["as2"].reshape(1, c2))
    adst2 = jnp.zeros((1, pad), jnp.float32).at[:, :c2].set(
        params["ad2"].reshape(1, c2))
    b2 = jnp.zeros((1, pad), jnp.float32).at[:, :c2].set(
        params["b2"].reshape(1, c2))

    inputs = (x.astype(jnp.bfloat16),          # eye -> exact in bf16
              adj.astype(jnp.int8),            # 0/1 mask -> int8 HBM stream
              w1h, asrc1, adst1, b1, w2h, asrc2, adst2, b2)
    return inputs, c2


@partial(jax.jit, static_argnames=("n_out",))
def gat_forward(x_bf, adj_i8, w1h, asrc1, adst1, b1, w2h, asrc2, adst2, b2,
                *, n_out):
    """Single fused pallas_call; everything fits one VMEM tile at this size."""
    n = x_bf.shape[0]
    pad = w2h.shape[-1]
    vmem = pl.BlockSpec(memory_space=pltpu.MemorySpace.VMEM)
    out = pl.pallas_call(
        fused_gat_kernel,
        out_shape=jax.ShapeDtypeStruct((n, pad), jnp.float32),
        in_specs=[vmem] * 10,
        out_specs=vmem,
    )(x_bf, adj_i8, w1h, asrc1, adst1, b1, w2h, asrc2, adst2, b2)
    return out[:, :n_out]                      # drop lane padding


def _glorot(key, shape):
    limit = math.sqrt(6.0 / (shape[-2] + shape[-1]))
    return jax.random.uniform(key, shape, jnp.float32, -limit, limit)


if __name__ == "__main__":
    N = 10  # total_docs (len(texts) in the reference)
    key = jax.random.PRNGKey(0)
    k1, k2, k3, k4, k5, k6 = jax.random.split(key, 6)

    # Deterministic synthetic parameters (PyG GATConv shapes; bias init zeros).
    params = {
        "W1": _glorot(k1, (N, 8 * 8)),        # lin: total_docs -> heads*out
        "as1": _glorot(k2, (8, 8)),           # att_src  [heads, out]
        "ad1": _glorot(k3, (8, 8)),           # att_dst  [heads, out]
        "b1": jnp.zeros((8 * 8,), jnp.float32),
        "W2": _glorot(k4, (8 * 8, N)),        # lin: 64 -> total_docs
        "as2": _glorot(k5, (1, N)),
        "ad2": _glorot(k6, (1, N)),
        "b2": jnp.zeros((N,), jnp.float32),
    }

    # Node features: identity matrix (x = torch.eye(total_docs)).
    x = jnp.eye(N, dtype=jnp.float32)

    # Deterministic synthetic undirected graph (stands in for the similarity
    # graph built from `texts`): ring + a few chords; symmetric + self-loops.
    edges = [(i, (i + 1) % N) for i in range(N)] + [(0, 5), (2, 7), (3, 8)]
    adj = jnp.eye(N, dtype=jnp.float32)       # self-loops (add_self_loops=True)
    for u, v in edges:
        adj = adj.at[u, v].set(1.0)
        adj = adj.at[v, u].set(1.0)

    kernel_inputs, n_out = prepare_gat_inputs(x, adj, params)  # one-time prep
    out = jax.block_until_ready(gat_forward(*kernel_inputs, n_out=n_out))
    assert out.shape == (N, N), out.shape
    assert bool(jnp.all(jnp.isfinite(out)))
    print("KERNEL_OK")
</pallas_src>

<mosaic_0001>
module attributes {stable_mosaic.version = 11 : i64} {
  func.func @fused_gat_kernel(%arg0: memref<10x10xbf16, #tpu.memory_space<vmem>>, %arg1: memref<10x10xi8, #tpu.memory_space<vmem>>, %arg2: memref<8x10x8xbf16, #tpu.memory_space<vmem>>, %arg3: memref<8x1x8xf32, #tpu.memory_space<vmem>>, %arg4: memref<8x1x8xf32, #tpu.memory_space<vmem>>, %arg5: memref<8x1x8xf32, #tpu.memory_space<vmem>>, %arg6: memref<8x8x128xbf16, #tpu.memory_space<vmem>>, %arg7: memref<1x128xf32, #tpu.memory_space<vmem>>, %arg8: memref<1x128xf32, #tpu.memory_space<vmem>>, %arg9: memref<1x128xf32, #tpu.memory_space<vmem>>, %arg10: memref<10x128xf32, #tpu.memory_space<vmem>>) attributes {dimension_semantics = [], scalar_prefetch = 0 : i64, scratch_operands = 0 : i64, tpu.core_type = #tpu.core_type<tc>} {
    %c0 = arith.constant 0 : index
    %c0_0 = arith.constant 0 : index
    %0 = vector.load %arg1[%c0, %c0_0] : memref<10x10xi8, #tpu.memory_space<vmem>>, vector<10x10xi8>
    %1 = arith.sitofp %0 : vector<10x10xi8> to vector<10x10xf32>
    %cst = arith.constant 5.000000e-01 : f32
    %2 = vector.broadcast %cst : f32 to vector<10x10xf32>
    %3 = arith.cmpf ogt, %1, %2 : vector<10x10xf32>
    %c0_1 = arith.constant 0 : index
    %c0_2 = arith.constant 0 : index
    %4 = vector.load %arg0[%c0_1, %c0_2] : memref<10x10xbf16, #tpu.memory_space<vmem>>, vector<10x10xbf16>
    %5 = vector.shape_cast %4 : vector<10x10xbf16> to vector<1x10x10xbf16>
    %6 = vector.shape_cast %5 : vector<1x10x10xbf16> to vector<1x10x10xbf16>
    %7 = vector.broadcast %6 : vector<1x10x10xbf16> to vector<8x10x10xbf16>
    %c0_3 = arith.constant 0 : index
    %c0_4 = arith.constant 0 : index
    %c0_5 = arith.constant 0 : index
    %8 = vector.load %arg2[%c0_3, %c0_4, %c0_5] : memref<8x10x8xbf16, #tpu.memory_space<vmem>>, vector<8x10x8xbf16>
    "tpu.trace_start"() <{level = 10 : i32, message = "hnf,hfc->hnc"}> : () -> ()
    %cst_6 = arith.constant dense<0.000000e+00> : vector<8x10x8xf32>
    %9 = tpu.matmul %7, %8, %cst_6 {dimension_numbers = #tpu.dot_dimension_numbers<[2], [1], [1], [2], [0, 0, 0, 1, 1, 2], [0], [0]>} : vector<8x10x10xbf16>, vector<8x10x8xbf16>, vector<8x10x8xf32> -> vector<8x10x8xf32>
    "tpu.trace_stop"() : () -> ()
    %c0_7 = arith.constant 0 : index
    %c0_8 = arith.constant 0 : index
    %c0_9 = arith.constant 0 : index
    %10 = vector.load %arg3[%c0_7, %c0_8, %c0_9] : memref<8x1x8xf32, #tpu.memory_space<vmem>>, vector<8x1x8xf32>
    %11 = vector.broadcast %10 : vector<8x1x8xf32> to vector<8x10x8xf32>
    %12 = arith.mulf %9, %11 : vector<8x10x8xf32>
    %cst_10 = arith.constant dense<0.000000e+00> : vector<8x10xf32>
    %13 = vector.multi_reduction <add>, %12, %cst_10 [2] : vector<8x10x8xf32> to vector<8x10xf32>
    %c0_11 = arith.constant 0 : index
    %c0_12 = arith.constant 0 : index
    %c0_13 = arith.constant 0 : index
    %14 = vector.load %arg4[%c0_11, %c0_12, %c0_13] : memref<8x1x8xf32, #tpu.memory_space<vmem>>, vector<8x1x8xf32>
    %15 = vector.broadcast %14 : vector<8x1x8xf32> to vector<8x10x8xf32>
    %16 = arith.mulf %9, %15 : vector<8x10x8xf32>
    %cst_14 = arith.constant dense<0.000000e+00> : vector<8x10xf32>
    %17 = vector.multi_reduction <add>, %16, %cst_14 [2] : vector<8x10x8xf32> to vector<8x10xf32>
    %18 = vector.shape_cast %17 : vector<8x10xf32> to vector<8x10x1xf32>
    %19 = vector.shape_cast %13 : vector<8x10xf32> to vector<8x1x10xf32>
    %20 = vector.broadcast %18 : vector<8x10x1xf32> to vector<8x10x10xf32>
    %21 = vector.broadcast %19 : vector<8x1x10xf32> to vector<8x10x10xf32>
    %22 = arith.addf %20, %21 : vector<8x10x10xf32>
    %cst_15 = arith.constant 0.000000e+00 : f32
    %23 = vector.broadcast %cst_15 : f32 to vector<8x10x10xf32>
    %24 = arith.cmpf oge, %22, %23 : vector<8x10x10xf32>
    %cst_16 = arith.constant 2.000000e-01 : f32
    %25 = vector.broadcast %cst_16 : f32 to vector<8x10x10xf32>
    %26 = arith.mulf %25, %22 : vector<8x10x10xf32>
    %27 = arith.select %24, %22, %26 : vector<8x10x10xi1>, vector<8x10x10xf32>
    %cst_17 = arith.constant -1.000000e+30 : f32
    %28 = vector.shape_cast %3 : vector<10x10xi1> to vector<1x10x10xi1>
    %29 = vector.broadcast %28 : vector<1x10x10xi1> to vector<8x10x10xi1>
    %30 = vector.broadcast %cst_17 : f32 to vector<8x10x10xf32>
    %31 = arith.select %29, %27, %30 : vector<8x10x10xi1>, vector<8x10x10xf32>
    %cst_18 = arith.constant dense<0xFF800000> : vector<8x10xf32>
    %32 = vector.multi_reduction <maximumf>, %31, %cst_18 [2] : vector<8x10x10xf32> to vector<8x10xf32>
    %33 = vector.shape_cast %32 : vector<8x10xf32> to vector<8x10x1xf32>
    %34 = vector.broadcast %33 : vector<8x10x1xf32> to vector<8x10x10xf32>
    %35 = arith.subf %31, %34 : vector<8x10x10xf32>
    %36 = math.exp %35 : vector<8x10x10xf32>
    %cst_19 = arith.constant dense<0.000000e+00> : vector<8x10xf32>
    %37 = vector.multi_reduction <add>, %36, %cst_19 [2] : vector<8x10x10xf32> to vector<8x10xf32>
    %38 = vector.shape_cast %37 : vector<8x10xf32> to vector<8x10x1xf32>
    %39 = arith.truncf %36 : vector<8x10x10xf32> to vector<8x10x10xbf16>
    %40 = arith.truncf %9 : vector<8x10x8xf32> to vector<8x10x8xbf16>
    "tpu.trace_start"() <{level = 10 : i32, message = "hij,hjc->hic"}> : () -> ()
    %cst_20 = arith.constant dense<0.000000e+00> : vector<8x10x8xf32>
    %41 = tpu.matmul %39, %40, %cst_20 {dimension_numbers = #tpu.dot_dimension_numbers<[2], [1], [1], [2], [0, 0, 0, 1, 1, 2], [0], [0]>} : vector<8x10x10xbf16>, vector<8x10x8xbf16>, vector<8x10x8xf32> -> vector<8x10x8xf32>
    "tpu.trace_stop"() : () -> ()
    %42 = tpu.reciprocal %38 {approx = true} : vector<8x10x1xf32> -> vector<8x10x1xf32>
    %43 = vector.broadcast %42 : vector<8x10x1xf32> to vector<8x10x8xf32>
    %44 = arith.mulf %41, %43 : vector<8x10x8xf32>
    %c0_21 = arith.constant 0 : index
    %c0_22 = arith.constant 0 : index
    %c0_23 = arith.constant 0 : index
    %45 = vector.load %arg5[%c0_21, %c0_22, %c0_23] : memref<8x1x8xf32, #tpu.memory_space<vmem>>, vector<8x1x8xf32>
    %46 = vector.broadcast %45 : vector<8x1x8xf32> to vector<8x10x8xf32>
    %47 = arith.addf %44, %46 : vector<8x10x8xf32>
    %cst_24 = arith.constant 0.000000e+00 : f32
    %48 = vector.broadcast %cst_24 : f32 to vector<8x10x8xf32>
    %49 = arith.cmpf ogt, %47, %48 : vector<8x10x8xf32>
    %cst_25 = arith.constant 0.000000e+00 : f32
    %50 = vector.broadcast %cst_25 : f32 to vector<8x10x8xf32>
    %51 = arith.minimumf %47, %50 : vector<8x10x8xf32>
    %52 = math.exp %51 : vector<8x10x8xf32>
    %cst_26 = arith.constant 1.000000e+00 : f32
    %53 = vector.broadcast %cst_26 : f32 to vector<8x10x8xf32>
    %54 = arith.subf %52, %53 : vector<8x10x8xf32>
    %55 = arith.select %49, %47, %54 : vector<8x10x8xi1>, vector<8x10x8xf32>
    %56 = arith.truncf %55 : vector<8x10x8xf32> to vector<8x10x8xbf16>
    %c0_27 = arith.constant 0 : index
    %c0_28 = arith.constant 0 : index
    %c0_29 = arith.constant 0 : index
    %57 = vector.load %arg6[%c0_27, %c0_28, %c0_29] : memref<8x8x128xbf16, #tpu.memory_space<vmem>>, vector<8x8x128xbf16>
    "tpu.trace_start"() <{level = 10 : i32, message = "hnc,hcm->hnm"}> : () -> ()
    %cst_30 = arith.constant dense<0.000000e+00> : vector<8x10x128xf32>
    %58 = tpu.matmul %56, %57, %cst_30 {dimension_numbers = #tpu.dot_dimension_numbers<[2], [1], [1], [2], [0, 0, 0, 1, 1, 2], [0], [0]>} : vector<8x10x8xbf16>, vector<8x8x128xbf16>, vector<8x10x128xf32> -> vector<8x10x128xf32>
    "tpu.trace_stop"() : () -> ()
    %cst_31 = arith.constant dense<0.000000e+00> : vector<10x128xf32>
    %59 = vector.multi_reduction <add>, %58, %cst_31 [0] : vector<8x10x128xf32> to vector<10x128xf32>
    %c0_32 = arith.constant 0 : index
    %c0_33 = arith.constant 0 : index
    %60 = vector.load %arg8[%c0_32, %c0_33] : memref<1x128xf32, #tpu.memory_space<vmem>>, vector<1x128xf32>
    %61 = vector.broadcast %60 : vector<1x128xf32> to vector<10x128xf32>
    %62 = arith.mulf %59, %61 : vector<10x128xf32>
    %cst_34 = arith.constant dense<0.000000e+00> : vector<10xf32>
    %63 = vector.multi_reduction <add>, %62, %cst_34 [1] : vector<10x128xf32> to vector<10xf32>
    %64 = vector.shape_cast %63 : vector<10xf32> to vector<10x1xf32>
    %c0_35 = arith.constant 0 : index
    %c0_36 = arith.constant 0 : index
    %65 = vector.load %arg7[%c0_35, %c0_36] : memref<1x128xf32, #tpu.memory_space<vmem>>, vector<1x128xf32>
    %66 = vector.broadcast %65 : vector<1x128xf32> to vector<10x128xf32>
    %67 = arith.mulf %59, %66 : vector<10x128xf32>
    %cst_37 = arith.constant dense<0.000000e+00> : vector<10xf32>
    %68 = vector.multi_reduction <add>, %67, %cst_37 [1] : vector<10x128xf32> to vector<10xf32>
    %69 = vector.shape_cast %68 : vector<10xf32> to vector<10x1xf32>
    %70 = tpu.transpose %69, [1, 0] : vector<10x1xf32> -> vector<1x10xf32>
    %71 = vector.broadcast %64 : vector<10x1xf32> to vector<10x10xf32>
    %72 = vector.broadcast %70 : vector<1x10xf32> to vector<10x10xf32>
    %73 = arith.addf %71, %72 : vector<10x10xf32>
    %cst_38 = arith.constant 0.000000e+00 : f32
    %74 = vector.broadcast %cst_38 : f32 to vector<10x10xf32>
    %75 = arith.cmpf oge, %73, %74 : vector<10x10xf32>
    %cst_39 = arith.constant 2.000000e-01 : f32
    %76 = vector.broadcast %cst_39 : f32 to vector<10x10xf32>
    %77 = arith.mulf %76, %73 : vector<10x10xf32>
    %78 = arith.select %75, %73, %77 : vector<10x10xi1>, vector<10x10xf32>
    %cst_40 = arith.constant -1.000000e+30 : f32
    %79 = vector.broadcast %cst_40 : f32 to vector<10x10xf32>
    %80 = arith.select %3, %78, %79 : vector<10x10xi1>, vector<10x10xf32>
    %cst_41 = arith.constant dense<0xFF800000> : vector<10xf32>
    %81 = vector.multi_reduction <maximumf>, %80, %cst_41 [1] : vector<10x10xf32> to vector<10xf32>
    %82 = vector.shape_cast %81 : vector<10xf32> to vector<10x1xf32>
    %83 = vector.broadcast %82 : vector<10x1xf32> to vector<10x10xf32>
    %84 = arith.subf %80, %83 : vector<10x10xf32>
    %85 = math.exp %84 : vector<10x10xf32>
    %cst_42 = arith.constant dense<0.000000e+00> : vector<10xf32>
    %86 = vector.multi_reduction <add>, %85, %cst_42 [1] : vector<10x10xf32> to vector<10xf32>
    %87 = vector.shape_cast %86 : vector<10xf32> to vector<10x1xf32>
    %88 = arith.truncf %85 : vector<10x10xf32> to vector<10x10xbf16>
    %89 = arith.truncf %59 : vector<10x128xf32> to vector<10x128xbf16>
    %cst_43 = arith.constant dense<0.000000e+00> : vector<10x128xf32>
    %90 = tpu.matmul %88, %89, %cst_43 {dimension_numbers = #tpu.dot_dimension_numbers<[1], [0], [0], [1], [0, 0, 1, 1], [], []>} : vector<10x10xbf16>, vector<10x128xbf16>, vector<10x128xf32> -> vector<10x128xf32>
    %91 = tpu.reciprocal %87 {approx = true} : vector<10x1xf32> -> vector<10x1xf32>
    %92 = vector.broadcast %91 : vector<10x1xf32> to vector<10x128xf32>
    %93 = arith.mulf %90, %92 : vector<10x128xf32>
    %c0_44 = arith.constant 0 : index
    %c0_45 = arith.constant 0 : index
    %94 = vector.load %arg9[%c0_44, %c0_45] : memref<1x128xf32, #tpu.memory_space<vmem>>, vector<1x128xf32>
    %95 = vector.broadcast %94 : vector<1x128xf32> to vector<10x128xf32>
    %96 = arith.addf %93, %95 : vector<10x128xf32>
    %c0_46 = arith.constant 0 : index
    %c0_47 = arith.constant 0 : index
    %97 = vector.load %arg10[%c0_46, %c0_47] : memref<10x128xf32, #tpu.memory_space<vmem>>, vector<10x128xf32>
    tpu.vector_store %arg10[%c0_46, %c0_47], %96 {strides = array<i32>} : memref<10x128xf32, #tpu.memory_space<vmem>>, vector<10x128xf32>,
    return
  }
}

</mosaic_0001>

<llo_original>
// kernel: gat_forward.1
$region0: #{gat_forward.1}
  #allocation0 [shape = 'u32[]', space=smem, size = 0x4, offset = 0x4, fixed_abs, tag = 'smem constant byte address 0x4 - core index']
  #allocation1 [shape = 'u32[72,128]{1,0:T(1,128)}', space=vmem, size = 0x9000, scoped, tag = 'internal scratch']
  %s0 = inlined_call_operand.vmem [shape: bf16[10,10], index: 0, kind: input, shape index: {}]
  %s1 = inlined_call_operand.vmem [shape: s8[10,10], index: 1, kind: input, shape index: {}]
  %s2 = inlined_call_operand.vmem [shape: bf16[8,10,8], index: 2, kind: input, shape index: {}]
  %s3 = inlined_call_operand.vmem [shape: f32[8,1,8], index: 3, kind: input, shape index: {}]
  %s4 = inlined_call_operand.vmem [shape: f32[8,1,8], index: 4, kind: input, shape index: {}]
  %s5 = inlined_call_operand.vmem [shape: f32[8,1,8], index: 5, kind: input, shape index: {}]
  %s6 = inlined_call_operand.vmem [shape: bf16[8,8,128], index: 6, kind: input, shape index: {}]
  %s7 = inlined_call_operand.vmem [shape: f32[1,128], index: 7, kind: input, shape index: {}]
  %s8 = inlined_call_operand.vmem [shape: f32[1,128], index: 8, kind: input, shape index: {}]
  %s9 = inlined_call_operand.vmem [shape: f32[1,128], index: 9, kind: input, shape index: {}]
  %s10 = inlined_call_operand.hbm [shape: f32[10,128], index: 10, kind: output, shape index: {}]
  %s11 = sld [smem:[#allocation0]]
  $region50: #{gat_forward.1} parent=0
    _
  %s13 = ssub.s32 1, %s11
  %s14 = scalar_select 0, %s13, %s11
  $region1: #{gat_forward.1} parent=0
    #allocation2 [shape = 'u8[8192]{0}', space=vmem, size = 0x2000, scoped, tag = 'output window, operand 0, single buffered']
    #allocation3 [shape = 's32[1]{0}', space=sflag, size = 0x4, scoped, tag = 'scoped memory for gat_forward.1']
    %15 = vsyncpa [#allocation3], 0
    // Predicated region
    $region2: #{gat_forward.1} parent=1 // pred_check
      _
    $region3: #{gat_forward.1} parent=1 // pred_check_branch
      %17 = sbr.rel (0) target = $region5
    $region4: #{gat_forward.1} parent=1 // pred_region
      _
    $region5: #{gat_forward.1} parent=1 // pred_fallthru
      _
    // Predicated region
    $region6: #{gat_forward.1} parent=1 // pred_check
      _
    $region7: #{gat_forward.1} parent=1 // pred_check_branch
      %19 = sbr.rel (0) target = $region9
    $region8: #{gat_forward.1} parent=1 // pred_region
      _
    $region9: #{gat_forward.1} parent=1 // pred_fallthru
      _
    // Predicated region
    $region10: #{gat_forward.1} parent=1 // pred_check
      _
    $region11: #{gat_forward.1} parent=1 // pred_check_branch
      %21 = sbr.rel (0) target = $region13
    $region12: #{gat_forward.1} parent=1 // pred_region
      _
    $region13: #{gat_forward.1} parent=1 // pred_fallthru
      _
    // Predicated region
    $region14: #{gat_forward.1} parent=1 // pred_check
      _
    $region15: #{gat_forward.1} parent=1 // pred_check_branch
      %23 = sbr.rel (0) target = $region17
    $region16: #{gat_forward.1} parent=1 // pred_region
      _
    $region17: #{gat_forward.1} parent=1 // pred_fallthru
      _
    // Predicated region
    $region18: #{gat_forward.1} parent=1 // pred_check
      _
    $region19: #{gat_forward.1} parent=1 // pred_check_branch
      %25 = sbr.rel (0) target = $region21
    $region20: #{gat_forward.1} parent=1 // pred_region
      _
    $region21: #{gat_forward.1} parent=1 // pred_fallthru
      _
    // Predicated region
    $region22: #{gat_forward.1} parent=1 // pred_check
      _
    $region23: #{gat_forward.1} parent=1 // pred_check_branch
      %27 = sbr.rel (0) target = $region25
    $region24: #{gat_forward.1} parent=1 // pred_region
      _
    $region25: #{gat_forward.1} parent=1 // pred_fallthru
      _
    // Predicated region
    $region26: #{gat_forward.1} parent=1 // pred_check
      _
    $region27: #{gat_forward.1} parent=1 // pred_check_branch
      %29 = sbr.rel (0) target = $region29
    $region28: #{gat_forward.1} parent=1 // pred_region
      _
    $region29: #{gat_forward.1} parent=1 // pred_fallthru
      _
    // Predicated region
    $region30: #{gat_forward.1} parent=1 // pred_check
      _
    $region31: #{gat_forward.1} parent=1 // pred_check_branch
      %31 = sbr.rel (0) target = $region33
    $region32: #{gat_forward.1} parent=1 // pred_region
      _
    $region33: #{gat_forward.1} parent=1 // pred_fallthru
      _
    // Predicated region
    $region34: #{gat_forward.1} parent=1 // pred_check
      _
    $region35: #{gat_forward.1} parent=1 // pred_check_branch
      %33 = sbr.rel (0) target = $region37
    $region36: #{gat_forward.1} parent=1 // pred_region
      _
    $region37: #{gat_forward.1} parent=1 // pred_fallthru
      _
    // Predicated region
    $region38: #{gat_forward.1} parent=1 // pred_check
      _
    $region39: #{gat_forward.1} parent=1 // pred_check_branch
      %35 = sbr.rel (0) target = $region41
    $region40: #{gat_forward.1} parent=1 // pred_region
      _
    $region41: #{gat_forward.1} parent=1 // pred_fallthru
      _
    %v37 = vld [vmem:[%s1] sm:$0x3]
    %v38 = vld [vmem:[%s1 + $0x2] sm:$0x1]
    %v39 = vunpack.c.0.s8 %v37
    %v40 = vunpack.c.0.s8 %v38
    %v41 = vcvt.s32.f32 %v39
    %v42 = vcvt.s32.f32 %v40
    %vm43 = vcmp.gt.f32.partialorder %v41, 0.5
    %vm44 = vcmp.gt.f32.partialorder %v42, 0.5
    %v45 = vld [vmem:[%s0] sm:$0xf]
    %v46 = vld [vmem:[%s0 + $0x4] sm:$0x1]
    %v47 = vld [vmem:[%s2] sm:$0xf]
    %v48 = vld [vmem:[%s2 + $0x4] sm:$0x1]
    %v49 = vld [vmem:[%s2 + $0x8] sm:$0xf]
    %v50 = vld [vmem:[%s2 + $0xc] sm:$0x1]
    %v51 = vld [vmem:[%s2 + $0x10] sm:$0xf]
    %v52 = vld [vmem:[%s2 + $0x14] sm:$0x1]
    %v53 = vld [vmem:[%s2 + $0x18] sm:$0xf]
    %v54 = vld [vmem:[%s2 + $0x1c] sm:$0x1]
    %v55 = vld [vmem:[%s2 + $0x20] sm:$0xf]
    %v56 = vld [vmem:[%s2 + $0x24] sm:$0x1]
    %v57 = vld [vmem:[%s2 + $0x28] sm:$0xf]
    %v58 = vld [vmem:[%s2 + $0x2c] sm:$0x1]
    %v59 = vld [vmem:[%s2 + $0x30] sm:$0xf]
    %v60 = vld [vmem:[%s2 + $0x34] sm:$0x1]
    %v61 = vld [vmem:[%s2 + $0x38] sm:$0xf]
    %v62 = vld [vmem:[%s2 + $0x3c] sm:$0x1]
    %v65 = vunpack.c.l.b16 %v45
    %v66 = vunpack.c.l.b16 %v46
    %v67 = vpack.c.b16 %v66, %v65
    %v70 = vunpack.c.l.b16 %v47
    %v71 = vunpack.c.l.b16 %v48
    %v72 = vpack.c.b16 %v71, %v70
    %vm73 = vcmask 80896
    %v75 = vsel %vm73, %v67, 0
    %vm77 = vcmask 1044480
    %v79 = vsel %vm77, %v72, 0
    %81 = vmatpush.bf16.msra.mxu0 0
    %82 = vmatpush.bf16.msra.mxu0 0
    %83 = vmatpush.bf16.msra.mxu0 0
    %84 = vmatpush.bf16.msra.mxu0 0
    %85 = vmatpush.bf16.msra.mxu0 0
    %86 = vmatpush.bf16.msra.mxu0 0
    %87 = vmatpush.bf16.msra.mxu0 0
    %88 = vmatpush.bf16.msra.mxu0 %v79
    %89 = vmatmul.bf16.gmra.mxu0 %v75
    %v90 = vpop.f32.mrf.mxu0
    %v91 = vadd.f32 0.0, %v90
    %v92 = vpop.f32.mrf.mxu0
    %v93 = vadd.f32 0.0, %v92
    %94 = vdwg.mxu0
    %v97 = vunpack.c.l.b16 %v49
    %v98 = vunpack.c.l.b16 %v50
    %v99 = vpack.c.b16 %v98, %v97
    %v101 = vsel %vm77, %v99, 0
    %103 = vmatpush.bf16.msra.mxu0 0
    %104 = vmatpush.bf16.msra.mxu0 0
    %105 = vmatpush.bf16.msra.mxu0 0
    %106 = vmatpush.bf16.msra.mxu0 0
    %107 = vmatpush.bf16.msra.mxu0 0
    %108 = vmatpush.bf16.msra.mxu0 0
    %109 = vmatpush.bf16.msra.mxu0 0
    %110 = vmatpush.bf16.msra.mxu0 %v101
    %111 = vmatmul.bf16.gmra.mxu0 %v75
    %v112 = vpop.f32.mrf.mxu0
    %v113 = vadd.f32 0.0, %v112
    %v114 = vpop.f32.mrf.mxu0
    %v115 = vadd.f32 0.0, %v114
    %116 = vdwg.mxu0
    %v119 = vunpack.c.l.b16 %v51
    %v120 = vunpack.c.l.b16 %v52
    %v121 = vpack.c.b16 %v120, %v119
    %v123 = vsel %vm77, %v121, 0
    %125 = vmatpush.bf16.msra.mxu0 0
    %126 = vmatpush.bf16.msra.mxu0 0
    %127 = vmatpush.bf16.msra.mxu0 0
    %128 = vmatpush.bf16.msra.mxu0 0
    %129 = vmatpush.bf16.msra.mxu0 0
    %130 = vmatpush.bf16.msra.mxu0 0
    %131 = vmatpush.bf16.msra.mxu0 0
    %132 = vmatpush.bf16.msra.mxu0 %v123
    %133 = vmatmul.bf16.gmra.mxu0 %v75
    %v134 = vpop.f32.mrf.mxu0
    %v135 = vadd.f32 0.0, %v134
    %v136 = vpop.f32.mrf.mxu0
    %v137 = vadd.f32 0.0, %v136
    %138 = vdwg.mxu0
    %v141 = vunpack.c.l.b16 %v53
    %v142 = vunpack.c.l.b16 %v54
    %v143 = vpack.c.b16 %v142, %v141
    %v145 = vsel %vm77, %v143, 0
    %147 = vmatpush.bf16.msra.mxu0 0
    %148 = vmatpush.bf16.msra.mxu0 0
    %149 = vmatpush.bf16.msra.mxu0 0
    %150 = vmatpush.bf16.msra.mxu0 0
    %151 = vmatpush.bf16.msra.mxu0 0
    %152 = vmatpush.bf16.msra.mxu0 0
    %153 = vmatpush.bf16.msra.mxu0 0
    %154 = vmatpush.bf16.msra.mxu0 %v145
    %155 = vmatmul.bf16.gmra.mxu0 %v75
    %v156 = vpop.f32.mrf.mxu0
    %v157 = vadd.f32 0.0, %v156
    %v158 = vpop.f32.mrf.mxu0
    %v159 = vadd.f32 0.0, %v158
    %160 = vdwg.mxu0
    %v163 = vunpack.c.l.b16 %v55
    %v164 = vunpack.c.l.b16 %v56
    %v165 = vpack.c.b16 %v164, %v163
    %v167 = vsel %vm77, %v165, 0
    %169 = vmatpush.bf16.msra.mxu0 0
    %170 = vmatpush.bf16.msra.mxu0 0
    %171 = vmatpush.bf16.msra.mxu0 0
    %172 = vmatpush.bf16.msra.mxu0 0
    %173 = vmatpush.bf16.msra.mxu0 0
    %174 = vmatpush.bf16.msra.mxu0 0
    %175 = vmatpush.bf16.msra.mxu0 0
    %176 = vmatpush.bf16.msra.mxu0 %v167
    %177 = vmatmul.bf16.gmra.mxu0 %v75
    %v178 = vpop.f32.mrf.mxu0
    %v179 = vadd.f32 0.0, %v178
    %v180 = vpop.f32.mrf.mxu0
    %v181 = vadd.f32 0.0, %v180
    %182 = vdwg.mxu0
    %v185 = vunpack.c.l.b16 %v57
    %v186 = vunpack.c.l.b16 %v58
    %v187 = vpack.c.b16 %v186, %v185
    %v189 = vsel %vm77, %v187, 0
    %191 = vmatpush.bf16.msra.mxu0 0
    %192 = vmatpush.bf16.msra.mxu0 0
    %193 = vmatpush.bf16.msra.mxu0 0
    %194 = vmatpush.bf16.msra.mxu0 0
    %195 = vmatpush.bf16.msra.mxu0 0
    %196 = vmatpush.bf16.msra.mxu0 0
    %197 = vmatpush.bf16.msra.mxu0 0
    %198 = vmatpush.bf16.msra.mxu0 %v189
    %199 = vmatmul.bf16.gmra.mxu0 %v75
    %v200 = vpop.f32.mrf.mxu0
    %v201 = vadd.f32 0.0, %v200
    %v202 = vpop.f32.mrf.mxu0
    %v203 = vadd.f32 0.0, %v202
    %204 = vdwg.mxu0
    %v207 = vunpack.c.l.b16 %v59
    %v208 = vunpack.c.l.b16 %v60
    %v209 = vpack.c.b16 %v208, %v207
    %v211 = vsel %vm77, %v209, 0
    %213 = vmatpush.bf16.msra.mxu0 0
    %214 = vmatpush.bf16.msra.mxu0 0
    %215 = vmatpush.bf16.msra.mxu0 0
    %216 = vmatpush.bf16.msra.mxu0 0
    %217 = vmatpush.bf16.msra.mxu0 0
    %218 = vmatpush.bf16.msra.mxu0 0
    %219 = vmatpush.bf16.msra.mxu0 0
    %220 = vmatpush.bf16.msra.mxu0 %v211
    %221 = vmatmul.bf16.gmra.mxu0 %v75
    %v222 = vpop.f32.mrf.mxu0
    %v223 = vadd.f32 0.0, %v222
    %v224 = vpop.f32.mrf.mxu0
    %v225 = vadd.f32 0.0, %v224
    %226 = vdwg.mxu0
    %v229 = vunpack.c.l.b16 %v61
    %v230 = vunpack.c.l.b16 %v62
    %v231 = vpack.c.b16 %v230, %v229
    %v233 = vsel %vm77, %v231, 0
    %235 = vmatpush.bf16.msra.mxu0 0
    %236 = vmatpush.bf16.msra.mxu0 0
    %237 = vmatpush.bf16.msra.mxu0 0
    %238 = vmatpush.bf16.msra.mxu0 0
    %239 = vmatpush.bf16.msra.mxu0 0
    %240 = vmatpush.bf16.msra.mxu0 0
    %241 = vmatpush.bf16.msra.mxu0 0
    %242 = vmatpush.bf16.msra.mxu0 %v233
    %243 = vmatmul.bf16.gmra.mxu0 %v75
    %v244 = vpop.f32.mrf.mxu0
    %v245 = vadd.f32 0.0, %v244
    %v246 = vpop.f32.mrf.mxu0
    %v247 = vadd.f32 0.0, %v246
    %248 = vdwg.mxu0
    %v249 = vld [vmem:[%s3] sm:$0x1]
    %v250 = vld [vmem:[%s3 + $0x1] sm:$0x1]
    %v251 = vld [vmem:[%s3 + $0x2] sm:$0x1]
    %v252 = vld [vmem:[%s3 + $0x3] sm:$0x1]
    %v253 = vld [vmem:[%s3 + $0x4] sm:$0x1]
    %v254 = vld [vmem:[%s3 + $0x5] sm:$0x1]
    %v255 = vld [vmem:[%s3 + $0x6] sm:$0x1]
    %v256 = vld [vmem:[%s3 + $0x7] sm:$0x1]
    %v265 = vperm.slane %v249, 0
    %v266 = vperm.slane %v250, 0
    %v267 = vperm.slane %v251, 0
    %v268 = vperm.slane %v252, 0
    %v269 = vperm.slane %v253, 0
    %v270 = vperm.slane %v254, 0
    %v271 = vperm.slane %v255, 0
    %v272 = vperm.slane %v256, 0
    %v281 = vmul.f32 %v91, %v265
    %v282 = vmul.f32 %v93, %v265
    %v283 = vmul.f32 %v113, %v266
    %v284 = vmul.f32 %v115, %v266
    %v285 = vmul.f32 %v135, %v267
    %v286 = vmul.f32 %v137, %v267
    %v287 = vmul.f32 %v157, %v268
    %v288 = vmul.f32 %v159, %v268
    %v289 = vmul.f32 %v179, %v269
    %v290 = vmul.f32 %v181, %v269
    %v291 = vmul.f32 %v201, %v270
    %v292 = vmul.f32 %v203, %v270
    %v293 = vmul.f32 %v223, %v271
    %v294 = vmul.f32 %v225, %v271
    %v295 = vmul.f32 %v245, %v272
    %v296 = vmul.f32 %v247, %v272
    %vm297 = vcmask 64512
    %v298 = vsel %vm297, %v281, 0.0
    %299 = vadd.xlane.f32.xlu0 %v298
    %v300 = vpop.xlane.xlu0 %299
    %vm301 = vcmask 58368
    %v302 = vsel %vm301, %v282, 0.0
    %303 = vadd.xlane.f32.xlu0 %v302
    %v304 = vpop.xlane.xlu0 %303
    %v305 = vsel %vm297, %v283, 0.0
    %306 = vadd.xlane.f32.xlu0 %v305
    %v307 = vpop.xlane.xlu0 %306
    %v308 = vsel %vm301, %v284, 0.0
    %309 = vadd.xlane.f32.xlu0 %v308
    %v310 = vpop.xlane.xlu0 %309
    %v311 = vsel %vm297, %v285, 0.0
    %312 = vadd.xlane.f32.xlu0 %v311
    %v313 = vpop.xlane.xlu0 %312
    %v314 = vsel %vm301, %v286, 0.0
    %315 = vadd.xlane.f32.xlu0 %v314
    %v316 = vpop.xlane.xlu0 %315
    %v317 = vsel %vm297, %v287, 0.0
    %318 = vadd.xlane.f32.xlu0 %v317
    %v319 = vpop.xlane.xlu0 %318
    %v320 = vsel %vm301, %v288, 0.0
    %321 = vadd.xlane.f32.xlu0 %v320
    %v322 = vpop.xlane.xlu0 %321
    %v323 = vsel %vm297, %v289, 0.0
    %324 = vadd.xlane.f32.xlu0 %v323
    %v325 = vpop.xlane.xlu0 %324
    %v326 = vsel %vm301, %v290, 0.0
    %327 = vadd.xlane.f32.xlu0 %v326
    %v328 = vpop.xlane.xlu0 %327
    %v329 = vsel %vm297, %v291, 0.0
    %330 = vadd.xlane.f32.xlu0 %v329
    %v331 = vpop.xlane.xlu0 %330
    %v332 = vsel %vm301, %v292, 0.0
    %333 = vadd.xlane.f32.xlu0 %v332
    %v334 = vpop.xlane.xlu0 %333
    %v335 = vsel %vm297, %v293, 0.0
    %336 = vadd.xlane.f32.xlu0 %v335
    %v337 = vpop.xlane.xlu0 %336
    %v338 = vsel %vm301, %v294, 0.0
    %339 = vadd.xlane.f32.xlu0 %v338
    %v340 = vpop.xlane.xlu0 %339
    %v341 = vsel %vm297, %v295, 0.0
    %342 = vadd.xlane.f32.xlu0 %v341
    %v343 = vpop.xlane.xlu0 %342
    %v344 = vsel %vm301, %v296, 0.0
    %345 = vadd.xlane.f32.xlu0 %v344
    %v346 = vpop.xlane.xlu0 %345
    %v347 = vld [vmem:[%s4] sm:$0x1]
    %v348 = vld [vmem:[%s4 + $0x1] sm:$0x1]
    %v349 = vld [vmem:[%s4 + $0x2] sm:$0x1]
    %v350 = vld [vmem:[%s4 + $0x3] sm:$0x1]
    %v351 = vld [vmem:[%s4 + $0x4] sm:$0x1]
    %v352 = vld [vmem:[%s4 + $0x5] sm:$0x1]
    %v353 = vld [vmem:[%s4 + $0x6] sm:$0x1]
    %v354 = vld [vmem:[%s4 + $0x7] sm:$0x1]
    %v363 = vperm.slane %v347, 0
    %v364 = vperm.slane %v348, 0
    %v365 = vperm.slane %v349, 0
    %v366 = vperm.slane %v350, 0
    %v367 = vperm.slane %v351, 0
    %v368 = vperm.slane %v352, 0
    %v369 = vperm.slane %v353, 0
    %v370 = vperm.slane %v354, 0
    %v379 = vmul.f32 %v91, %v363
    %v380 = vmul.f32 %v93, %v363
    %v381 = vmul.f32 %v113, %v364
    %v382 = vmul.f32 %v115, %v364
    %v383 = vmul.f32 %v135, %v365
    %v384 = vmul.f32 %v137, %v365
    %v385 = vmul.f32 %v157, %v366
    %v386 = vmul.f32 %v159, %v366
    %v387 = vmul.f32 %v179, %v367
    %v388 = vmul.f32 %v181, %v367
    %v389 = vmul.f32 %v201, %v368
    %v390 = vmul.f32 %v203, %v368
    %v391 = vmul.f32 %v223, %v369
    %v392 = vmul.f32 %v225, %v369
    %v393 = vmul.f32 %v245, %v370
    %v394 = vmul.f32 %v247, %v370
    %v395 = vsel %vm297, %v379, 0.0
    %396 = vadd.xlane.f32.xlu0 %v395
    %v397 = vpop.xlane.xlu0 %396
    %v398 = vsel %vm301, %v380, 0.0
    %399 = vadd.xlane.f32.xlu0 %v398
    %v400 = vpop.xlane.xlu0 %399
    %v401 = vsel %vm297, %v381, 0.0
    %402 = vadd.xlane.f32.xlu0 %v401
    %v403 = vpop.xlane.xlu0 %402
    %v404 = vsel %vm301, %v382, 0.0
    %405 = vadd.xlane.f32.xlu0 %v404
    %v406 = vpop.xlane.xlu0 %405
    %v407 = vsel %vm297, %v383, 0.0
    %408 = vadd.xlane.f32.xlu0 %v407
    %v409 = vpop.xlane.xlu0 %408
    %v410 = vsel %vm301, %v384, 0.0
    %411 = vadd.xlane.f32.xlu0 %v410
    %v412 = vpop.xlane.xlu0 %411
    %v413 = vsel %vm297, %v385, 0.0
    %414 = vadd.xlane.f32.xlu0 %v413
    %v415 = vpop.xlane.xlu0 %414
    %v416 = vsel %vm301, %v386, 0.0
    %417 = vadd.xlane.f32.xlu0 %v416
    %v418 = vpop.xlane.xlu0 %417
    %v419 = vsel %vm297, %v387, 0.0
    %420 = vadd.xlane.f32.xlu0 %v419
    %v421 = vpop.xlane.xlu0 %420
    %v422 = vsel %vm301, %v388, 0.0
    %423 = vadd.xlane.f32.xlu0 %v422
    %v424 = vpop.xlane.xlu0 %423
    %v425 = vsel %vm297, %v389, 0.0
    %426 = vadd.xlane.f32.xlu0 %v425
    %v427 = vpop.xlane.xlu0 %426
    %v428 = vsel %vm301, %v390, 0.0
    %429 = vadd.xlane.f32.xlu0 %v428
    %v430 = vpop.xlane.xlu0 %429
    %v431 = vsel %vm297, %v391, 0.0
    %432 = vadd.xlane.f32.xlu0 %v431
    %v433 = vpop.xlane.xlu0 %432
    %v434 = vsel %vm301, %v392, 0.0
    %435 = vadd.xlane.f32.xlu0 %v434
    %v436 = vpop.xlane.xlu0 %435
    %v437 = vsel %vm297, %v393, 0.0
    %438 = vadd.xlane.f32.xlu0 %v437
    %v439 = vpop.xlane.xlu0 %438
    %v440 = vsel %vm301, %v394, 0.0
    %441 = vadd.xlane.f32.xlu0 %v440
    %v442 = vpop.xlane.xlu0 %441
    %v459 = vlaneseq
    %v460 = vand.u32 %v459, 127
    %v461 = vperm.slane %v300, %v460
    %v462 = vadd.s32 %v460, 4294967288
    %v463 = vperm.slane %v304, %v462
    %vm464 = vcmask 130112
    %v465 = vsel %vm464, %v463, %v461
    %v466 = vperm.slane %v307, %v460
    %v467 = vperm.slane %v310, %v462
    %v468 = vsel %vm464, %v467, %v466
    %v469 = vperm.slane %v313, %v460
    %v470 = vperm.slane %v316, %v462
    %v471 = vsel %vm464, %v470, %v469
    %v472 = vperm.slane %v319, %v460
    %v473 = vperm.slane %v322, %v462
    %v474 = vsel %vm464, %v473, %v472
    %v475 = vperm.slane %v325, %v460
    %v476 = vperm.slane %v328, %v462
    %v477 = vsel %vm464, %v476, %v475
    %v478 = vperm.slane %v331, %v460
    %v479 = vperm.slane %v334, %v462
    %v480 = vsel %vm464, %v479, %v478
    %v481 = vperm.slane %v337, %v460
    %v482 = vperm.slane %v340, %v462
    %v483 = vsel %vm464, %v482, %v481
    %v484 = vperm.slane %v343, %v460
    %v485 = vperm.slane %v346, %v462
    %v486 = vsel %vm464, %v485, %v484
    %vm487 = vcmask 1042434
    %v488 = vsel %vm487, %v465, %v465
    %vm489 = vcmask 1043459
    %v490 = vsel %vm489, %v465, %v488
    %vm491 = vcmask 1044484
    %v492 = vsel %vm491, %v465, %v490
    %vm493 = vcmask 1045509
    %v494 = vsel %vm493, %v465, %v492
    %vm495 = vcmask 1046534
    %v496 = vsel %vm495, %v465, %v494
    %vm497 = vcmask 1047559
    %v498 = vsel %vm497, %v465, %v496
    %v499 = vsel %vm487, %v468, %v468
    %v500 = vsel %vm489, %v468, %v499
    %v501 = vsel %vm491, %v468, %v500
    %v502 = vsel %vm493, %v468, %v501
    %v503 = vsel %vm495, %v468, %v502
    %v504 = vsel %vm497, %v468, %v503
    %v505 = vsel %vm487, %v471, %v471
    %v506 = vsel %vm489, %v471, %v505
    %v507 = vsel %vm491, %v471, %v506
    %v508 = vsel %vm493, %v471, %v507
    %v509 = vsel %vm495, %v471, %v508
    %v510 = vsel %vm497, %v471, %v509
    %v511 = vsel %vm487, %v474, %v474
    %v512 = vsel %vm489, %v474, %v511
    %v513 = vsel %vm491, %v474, %v512
    %v514 = vsel %vm493, %v474, %v513
    %v515 = vsel %vm495, %v474, %v514
    %v516 = vsel %vm497, %v474, %v515
    %v517 = vsel %vm487, %v477, %v477
    %v518 = vsel %vm489, %v477, %v517
    %v519 = vsel %vm491, %v477, %v518
    %v520 = vsel %vm493, %v477, %v519
    %v521 = vsel %vm495, %v477, %v520
    %v522 = vsel %vm497, %v477, %v521
    %v523 = vsel %vm487, %v480, %v480
    %v524 = vsel %vm489, %v480, %v523
    %v525 = vsel %vm491, %v480, %v524
    %v526 = vsel %vm493, %v480, %v525
    %v527 = vsel %vm495, %v480, %v526
    %v528 = vsel %vm497, %v480, %v527
    %v529 = vsel %vm487, %v483, %v483
    %v530 = vsel %vm489, %v483, %v529
    %v531 = vsel %vm491, %v483, %v530
    %v532 = vsel %vm493, %v483, %v531
    %v533 = vsel %vm495, %v483, %v532
    %v534 = vsel %vm497, %v483, %v533
    %v535 = vsel %vm487, %v486, %v486
    %v536 = vsel %vm489, %v486, %v535
    %v537 = vsel %vm491, %v486, %v536
    %v538 = vsel %vm493, %v486, %v537
    %v539 = vsel %vm495, %v486, %v538
    %v540 = vsel %vm497, %v486, %v539
    %v557 = vadd.f32 %v397, %v498
    %v558 = vadd.f32 %v400, %v465
    %v559 = vadd.f32 %v403, %v504
    %v560 = vadd.f32 %v406, %v468
    %v561 = vadd.f32 %v409, %v510
    %v562 = vadd.f32 %v412, %v471
    %v563 = vadd.f32 %v415, %v516
    %v564 = vadd.f32 %v418, %v474
    %v565 = vadd.f32 %v421, %v522
    %v566 = vadd.f32 %v424, %v477
    %v567 = vadd.f32 %v427, %v528
    %v568 = vadd.f32 %v430, %v480
    %v569 = vadd.f32 %v433, %v534
    %v570 = vadd.f32 %v436, %v483
    %v571 = vadd.f32 %v439, %v540
    %v572 = vadd.f32 %v442, %v486
    %vm573 = vcmp.ge.f32.partialorder %v557, 0.0
    %vm574 = vcmp.ge.f32.partialorder %v558, 0.0
    %vm575 = vcmp.ge.f32.partialorder %v559, 0.0
    %vm576 = vcmp.ge.f32.partialorder %v560, 0.0
    %vm577 = vcmp.ge.f32.partialorder %v561, 0.0
    %vm578 = vcmp.ge.f32.partialorder %v562, 0.0
    %vm579 = vcmp.ge.f32.partialorder %v563, 0.0
    %vm580 = vcmp.ge.f32.partialorder %v564, 0.0
    %vm581 = vcmp.ge.f32.partialorder %v565, 0.0
    %vm582 = vcmp.ge.f32.partialorder %v566, 0.0
    %vm583 = vcmp.ge.f32.partialorder %v567, 0.0
    %vm584 = vcmp.ge.f32.partialorder %v568, 0.0
    %vm585 = vcmp.ge.f32.partialorder %v569, 0.0
    %vm586 = vcmp.ge.f32.partialorder %v570, 0.0
    %vm587 = vcmp.ge.f32.partialorder %v571, 0.0
    %vm588 = vcmp.ge.f32.partialorder %v572, 0.0
    %v589 = vmul.f32 %v557, 0.2
    %v590 = vmul.f32 %v558, 0.2
    %v591 = vmul.f32 %v559, 0.2
    %v592 = vmul.f32 %v560, 0.2
    %v593 = vmul.f32 %v561, 0.2
    %v594 = vmul.f32 %v562, 0.2
    %v595 = vmul.f32 %v563, 0.2
    %v596 = vmul.f32 %v564, 0.2
    %v597 = vmul.f32 %v565, 0.2
    %v598 = vmul.f32 %v566, 0.2
    %v599 = vmul.f32 %v567, 0.2
    %v600 = vmul.f32 %v568, 0.2
    %v601 = vmul.f32 %v569, 0.2
    %v602 = vmul.f32 %v570, 0.2
    %v603 = vmul.f32 %v571, 0.2
    %v604 = vmul.f32 %v572, 0.2
    %v605 = vsel %vm573, %v557, %v589
    %v606 = vsel %vm574, %v558, %v590
    %v607 = vsel %vm575, %v559, %v591
    %v608 = vsel %vm576, %v560, %v592
    %v609 = vsel %vm577, %v561, %v593
    %v610 = vsel %vm578, %v562, %v594
    %v611 = vsel %vm579, %v563, %v595
    %v612 = vsel %vm580, %v564, %v596
    %v613 = vsel %vm581, %v565, %v597
    %v614 = vsel %vm582, %v566, %v598
    %v615 = vsel %vm583, %v567, %v599
    %v616 = vsel %vm584, %v568, %v600
    %v617 = vsel %vm585, %v569, %v601
    %v618 = vsel %vm586, %v570, %v602
    %v619 = vsel %vm587, %v571, %v603
    %v620 = vsel %vm588, %v572, %v604
    %v621 = vsel %vm43, 1, 0
    %v622 = vsel %vm44, 1, 0
    %vm623 = vcmp.eq.s32.totalorder %v621, 1
    %vm624 = vcmp.eq.s32.totalorder %v622, 1
    %v625 = vsel %vm623, %v605, -1e+30
    %v626 = vsel %vm624, %v606, -1e+30
    %v627 = vsel %vm623, %v607, -1e+30
    %v628 = vsel %vm624, %v608, -1e+30
    %v629 = vsel %vm623, %v609, -1e+30
    %v630 = vsel %vm624, %v610, -1e+30
    %v631 = vsel %vm623, %v611, -1e+30
    %v632 = vsel %vm624, %v612, -1e+30
    %v633 = vsel %vm623, %v613, -1e+30
    %v634 = vsel %vm624, %v614, -1e+30
    %v635 = vsel %vm623, %v615, -1e+30
    %v636 = vsel %vm624, %v616, -1e+30
    %v637 = vsel %vm623, %v617, -1e+30
    %v638 = vsel %vm624, %v618, -1e+30
    %v639 = vsel %vm623, %v619, -1e+30
    %v640 = vsel %vm624, %v620, -1e+30
    %v641 = vsel %vm73, %v625, -inf
    %642 = vmax.xlane.f32.xlu0 %v641
    %v643 = vpop.xlane.xlu0 %642
    %vm644 = vcmask 74752
    %v645 = vsel %vm644, %v626, -inf
    %646 = vmax.xlane.f32.xlu0 %v645
    %v647 = vpop.xlane.xlu0 %646
    %v648 = vsel %vm73, %v627, -inf
    %649 = vmax.xlane.f32.xlu0 %v648
    %v650 = vpop.xlane.xlu0 %649
    %v651 = vsel %vm644, %v628, -inf
    %652 = vmax.xlane.f32.xlu0 %v651
    %v653 = vpop.xlane.xlu0 %652
    %v654 = vsel %vm73, %v629, -inf
    %655 = vmax.xlane.f32.xlu0 %v654
    %v656 = vpop.xlane.xlu0 %655
    %v657 = vsel %vm644, %v630, -inf
    %658 = vmax.xlane.f32.xlu0 %v657
    %v659 = vpop.xlane.xlu0 %658
    %v660 = vsel %vm73, %v631, -inf
    %661 = vmax.xlane.f32.xlu0 %v660
    %v662 = vpop.xlane.xlu0 %661
    %v663 = vsel %vm644, %v632, -inf
    %664 = vmax.xlane.f32.xlu0 %v663
    %v665 = vpop.xlane.xlu0 %664
    %v666 = vsel %vm73, %v633, -inf
    %667 = vmax.xlane.f32.xlu0 %v666
    %v668 = vpop.xlane.xlu0 %667
    %v669 = vsel %vm644, %v634, -inf
    %670 = vmax.xlane.f32.xlu0 %v669
    %v671 = vpop.xlane.xlu0 %670
    %v672 = vsel %vm73, %v635, -inf
    %673 = vmax.xlane.f32.xlu0 %v672
    %v674 = vpop.xlane.xlu0 %673
    %v675 = vsel %vm644, %v636, -inf
    %676 = vmax.xlane.f32.xlu0 %v675
    %v677 = vpop.xlane.xlu0 %676
    %v678 = vsel %vm73, %v637, -inf
    %679 = vmax.xlane.f32.xlu0 %v678
    %v680 = vpop.xlane.xlu0 %679
    %v681 = vsel %vm644, %v638, -inf
    %682 = vmax.xlane.f32.xlu0 %v681
    %v683 = vpop.xlane.xlu0 %682
    %v684 = vsel %vm73, %v639, -inf
    %685 = vmax.xlane.f32.xlu0 %v684
    %v686 = vpop.xlane.xlu0 %685
    %v687 = vsel %vm644, %v640, -inf
    %688 = vmax.xlane.f32.xlu0 %v687
    %v689 = vpop.xlane.xlu0 %688
    %v690 = vsub.f32 %v625, %v643
    %v691 = vsub.f32 %v626, %v647
    %v692 = vsub.f32 %v627, %v650
    %v693 = vsub.f32 %v628, %v653
    %v694 = vsub.f32 %v629, %v656
    %v695 = vsub.f32 %v630, %v659
    %v696 = vsub.f32 %v631, %v662
    %v697 = vsub.f32 %v632, %v665
    %v698 = vsub.f32 %v633, %v668
    %v699 = vsub.f32 %v634, %v671
    %v700 = vsub.f32 %v635, %v674
    %v701 = vsub.f32 %v636, %v677
    %v702 = vsub.f32 %v637, %v680
    %v703 = vsub.f32 %v638, %v683
    %v704 = vsub.f32 %v639, %v686
    %v705 = vsub.f32 %v640, %v689
    %v706 = vmul.f32 %v690, 1.442695
    %v707 = vpow.pop %v706
    %v708 = vmul.f32 %v691, 1.442695
    %v709 = vpow.pop %v708
    %v710 = vmul.f32 %v692, 1.442695
    %v711 = vpow.pop %v710
    %v712 = vmul.f32 %v693, 1.442695
    %v713 = vpow.pop %v712
    %v714 = vmul.f32 %v694, 1.442695
    %v715 = vpow.pop %v714
    %v716 = vmul.f32 %v695, 1.442695
    %v717 = vpow.pop %v716
    %v718 = vmul.f32 %v696, 1.442695
    %v719 = vpow.pop %v718
    %v720 = vmul.f32 %v697, 1.442695
    %v721 = vpow.pop %v720
    %v722 = vmul.f32 %v698, 1.442695
    %v723 = vpow.pop %v722
    %v724 = vmul.f32 %v699, 1.442695
    %v725 = vpow.pop %v724
    %v726 = vmul.f32 %v700, 1.442695
    %v727 = vpow.pop %v726
    %v728 = vmul.f32 %v701, 1.442695
    %v729 = vpow.pop %v728
    %v730 = vmul.f32 %v702, 1.442695
    %v731 = vpow.pop %v730
    %v732 = vmul.f32 %v703, 1.442695
    %v733 = vpow.pop %v732
    %v734 = vmul.f32 %v704, 1.442695
    %v735 = vpow.pop %v734
    %v736 = vmul.f32 %v705, 1.442695
    %v737 = vpow.pop %v736
    %v738 = vsel %vm73, %v707, 0.0
    %739 = vadd.xlane.f32.xlu0 %v738
    %v740 = vpop.xlane.xlu0 %739
    %v741 = vsel %vm644, %v709, 0.0
    %742 = vadd.xlane.f32.xlu0 %v741
    %v743 = vpop.xlane.xlu0 %742
    %v744 = vsel %vm73, %v711, 0.0
    %745 = vadd.xlane.f32.xlu0 %v744
    %v746 = vpop.xlane.xlu0 %745
    %v747 = vsel %vm644, %v713, 0.0
    %748 = vadd.xlane.f32.xlu0 %v747
    %v749 = vpop.xlane.xlu0 %748
    %v750 = vsel %vm73, %v715, 0.0
    %751 = vadd.xlane.f32.xlu0 %v750
    %v752 = vpop.xlane.xlu0 %751
    %v753 = vsel %vm644, %v717, 0.0
    %754 = vadd.xlane.f32.xlu0 %v753
    %v755 = vpop.xlane.xlu0 %754
    %v756 = vsel %vm73, %v719, 0.0
    %757 = vadd.xlane.f32.xlu0 %v756
    %v758 = vpop.xlane.xlu0 %757
    %v759 = vsel %vm644, %v721, 0.0
    %760 = vadd.xlane.f32.xlu0 %v759
    %v761 = vpop.xlane.xlu0 %760
    %v762 = vsel %vm73, %v723, 0.0
    %763 = vadd.xlane.f32.xlu0 %v762
    %v764 = vpop.xlane.xlu0 %763
    %v765 = vsel %vm644, %v725, 0.0
    %766 = vadd.xlane.f32.xlu0 %v765
    %v767 = vpop.xlane.xlu0 %766
    %v768 = vsel %vm73, %v727, 0.0
    %769 = vadd.xlane.f32.xlu0 %v768
    %v770 = vpop.xlane.xlu0 %769
    %v771 = vsel %vm644, %v729, 0.0
    %772 = vadd.xlane.f32.xlu0 %v771
    %v773 = vpop.xlane.xlu0 %772
    %v774 = vsel %vm73, %v731, 0.0
    %775 = vadd.xlane.f32.xlu0 %v774
    %v776 = vpop.xlane.xlu0 %775
    %v777 = vsel %vm644, %v733, 0.0
    %778 = vadd.xlane.f32.xlu0 %v777
    %v779 = vpop.xlane.xlu0 %778
    %v780 = vsel %vm73, %v735, 0.0
    %781 = vadd.xlane.f32.xlu0 %v780
    %v782 = vpop.xlane.xlu0 %781
    %v783 = vsel %vm644, %v737, 0.0
    %784 = vadd.xlane.f32.xlu0 %v783
    %v785 = vpop.xlane.xlu0 %784
    %v786 = vpack.c.bf16 %v707, %v707
    %v787 = vpack.c.bf16 %v709, %v709
    %v788 = vpack.c.bf16 %v711, %v711
    %v789 = vpack.c.bf16 %v713, %v713
    %v790 = vpack.c.bf16 %v715, %v715
    %v791 = vpack.c.bf16 %v717, %v717
    %v792 = vpack.c.bf16 %v719, %v719
    %v793 = vpack.c.bf16 %v721, %v721
    %v794 = vpack.c.bf16 %v723, %v723
    %v795 = vpack.c.bf16 %v725, %v725
    %v796 = vpack.c.bf16 %v727, %v727
    %v797 = vpack.c.bf16 %v729, %v729
    %v798 = vpack.c.bf16 %v731, %v731
    %v799 = vpack.c.bf16 %v733, %v733
    %v800 = vpack.c.bf16 %v735, %v735
    %v801 = vpack.c.bf16 %v737, %v737
    %v802 = vpack.c.bf16 %v91, %v91
    %v803 = vpack.c.bf16 %v93, %v93
    %v804 = vpack.c.bf16 %v113, %v113
    %v805 = vpack.c.bf16 %v115, %v115
    %v806 = vpack.c.bf16 %v135, %v135
    %v807 = vpack.c.bf16 %v137, %v137
    %v808 = vpack.c.bf16 %v157, %v157
    %v809 = vpack.c.bf16 %v159, %v159
    %v810 = vpack.c.bf16 %v179, %v179
    %v811 = vpack.c.bf16 %v181, %v181
    %v812 = vpack.c.bf16 %v201, %v201
    %v813 = vpack.c.bf16 %v203, %v203
    %v814 = vpack.c.bf16 %v223, %v223
    %v815 = vpack.c.bf16 %v225, %v225
    %v816 = vpack.c.bf16 %v245, %v245
    %v817 = vpack.c.bf16 %v247, %v247
    %v820 = vunpack.c.l.b16 %v786
    %v821 = vunpack.c.l.b16 %v787
    %v822 = vpack.c.b16 %v821, %v820
    %v825 = vunpack.c.l.b16 %v802
    %v826 = vunpack.c.l.b16 %v803
    %v827 = vpack.c.b16 %v826, %v825
    %v829 = vsel %vm73, %v822, 0
    %v832 = vsel %vm77, %v827, 0
    %834 = vmatpush.bf16.msra.mxu0 0
    %835 = vmatpush.bf16.msra.mxu0 0
    %836 = vmatpush.bf16.msra.mxu0 0
    %837 = vmatpush.bf16.msra.mxu0 0
    %838 = vmatpush.bf16.msra.mxu0 0
    %839 = vmatpush.bf16.msra.mxu0 0
    %840 = vmatpush.bf16.msra.mxu0 0
    %841 = vmatpush.bf16.msra.mxu0 %v832
    %842 = vmatmul.bf16.gmra.mxu0 %v829
    %v843 = vpop.f32.mrf.mxu0
    %v844 = vadd.f32 0.0, %v843
    %v845 = vpop.f32.mrf.mxu0
    %v846 = vadd.f32 0.0, %v845
    %847 = vdwg.mxu0
    %v850 = vunpack.c.l.b16 %v788
    %v851 = vunpack.c.l.b16 %v789
    %v852 = vpack.c.b16 %v851, %v850
    %v855 = vunpack.c.l.b16 %v804
    %v856 = vunpack.c.l.b16 %v805
    %v857 = vpack.c.b16 %v856, %v855
    %v859 = vsel %vm73, %v852, 0
    %v862 = vsel %vm77, %v857, 0
    %864 = vmatpush.bf16.msra.mxu0 0
    %865 = vmatpush.bf16.msra.mxu0 0
    %866 = vmatpush.bf16.msra.mxu0 0
    %867 = vmatpush.bf16.msra.mxu0 0
    %868 = vmatpush.bf16.msra.mxu0 0
    %869 = vmatpush.bf16.msra.mxu0 0
    %870 = vmatpush.bf16.msra.mxu0 0
    %871 = vmatpush.bf16.msra.mxu0 %v862
    %872 = vmatmul.bf16.gmra.mxu0 %v859
    %v873 = vpop.f32.mrf.mxu0
    %v874 = vadd.f32 0.0, %v873
    %v875 = vpop.f32.mrf.mxu0
    %v876 = vadd.f32 0.0, %v875
    %877 = vdwg.mxu0
    %v880 = vunpack.c.l.b16 %v790
    %v881 = vunpack.c.l.b16 %v791
    %v882 = vpack.c.b16 %v881, %v880
    %v885 = vunpack.c.l.b16 %v806
    %v886 = vunpack.c.l.b16 %v807
    %v887 = vpack.c.b16 %v886, %v885
    %v889 = vsel %vm73, %v882, 0
    %v892 = vsel %vm77, %v887, 0
    %894 = vmatpush.bf16.msra.mxu0 0
    %895 = vmatpush.bf16.msra.mxu0 0
    %896 = vmatpush.bf16.msra.mxu0 0
    %897 = vmatpush.bf16.msra.mxu0 0
    %898 = vmatpush.bf16.msra.mxu0 0
    %899 = vmatpush.bf16.msra.mxu0 0
    %900 = vmatpush.bf16.msra.mxu0 0
    %901 = vmatpush.bf16.msra.mxu0 %v892
    %902 = vmatmul.bf16.gmra.mxu0 %v889
    %v903 = vpop.f32.mrf.mxu0
    %v904 = vadd.f32 0.0, %v903
    %v905 = vpop.f32.mrf.mxu0
    %v906 = vadd.f32 0.0, %v905
    %907 = vdwg.mxu0
    %v910 = vunpack.c.l.b16 %v792
    %v911 = vunpack.c.l.b16 %v793
    %v912 = vpack.c.b16 %v911, %v910
    %v915 = vunpack.c.l.b16 %v808
    %v916 = vunpack.c.l.b16 %v809
    %v917 = vpack.c.b16 %v916, %v915
    %v919 = vsel %vm73, %v912, 0
    %v922 = vsel %vm77, %v917, 0
    %924 = vmatpush.bf16.msra.mxu0 0
    %925 = vmatpush.bf16.msra.mxu0 0
    %926 = vmatpush.bf16.msra.mxu0 0
    %927 = vmatpush.bf16.msra.mxu0 0
    %928 = vmatpush.bf16.msra.mxu0 0
    %929 = vmatpush.bf16.msra.mxu0 0
    %930 = vmatpush.bf16.msra.mxu0 0
    %931 = vmatpush.bf16.msra.mxu0 %v922
    %932 = vmatmul.bf16.gmra.mxu0 %v919
    %v933 = vpop.f32.mrf.mxu0
    %v934 = vadd.f32 0.0, %v933
    %v935 = vpop.f32.mrf.mxu0
    %v936 = vadd.f32 0.0, %v935
    %937 = vdwg.mxu0
    %v940 = vunpack.c.l.b16 %v794
    %v941 = vunpack.c.l.b16 %v795
    %v942 = vpack.c.b16 %v941, %v940
    %v945 = vunpack.c.l.b16 %v810
    %v946 = vunpack.c.l.b16 %v811
    %v947 = vpack.c.b16 %v946, %v945
    %v949 = vsel %vm73, %v942, 0
    %v952 = vsel %vm77, %v947, 0
    %954 = vmatpush.bf16.msra.mxu0 0
    %955 = vmatpush.bf16.msra.mxu0 0
    %956 = vmatpush.bf16.msra.mxu0 0
    %957 = vmatpush.bf16.msra.mxu0 0
    %958 = vmatpush.bf16.msra.mxu0 0
    %959 = vmatpush.bf16.msra.mxu0 0
    %960 = vmatpush.bf16.msra.mxu0 0
    %961 = vmatpush.bf16.msra.mxu0 %v952
    %962 = vmatmul.bf16.gmra.mxu0 %v949
    %v963 = vpop.f32.mrf.mxu0
    %v964 = vadd.f32 0.0, %v963
    %v965 = vpop.f32.mrf.mxu0
    %v966 = vadd.f32 0.0, %v965
    %967 = vdwg.mxu0
    %v970 = vunpack.c.l.b16 %v796
    %v971 = vunpack.c.l.b16 %v797
    %v972 = vpack.c.b16 %v971, %v970
    %v975 = vunpack.c.l.b16 %v812
    %v976 = vunpack.c.l.b16 %v813
    %v977 = vpack.c.b16 %v976, %v975
    %v979 = vsel %vm73, %v972, 0
    %v982 = vsel %vm77, %v977, 0
    %984 = vmatpush.bf16.msra.mxu0 0
    %985 = vmatpush.bf16.msra.mxu0 0
    %986 = vmatpush.bf16.msra.mxu0 0
    %987 = vmatpush.bf16.msra.mxu0 0
    %988 = vmatpush.bf16.msra.mxu0 0
    %989 = vmatpush.bf16.msra.mxu0 0
    %990 = vmatpush.bf16.msra.mxu0 0
    %991 = vmatpush.bf16.msra.mxu0 %v982
    %992 = vmatmul.bf16.gmra.mxu0 %v979
    %v993 = vpop.f32.mrf.mxu0
    %v994 = vadd.f32 0.0, %v993
    %v995 = vpop.f32.mrf.mxu0
    %v996 = vadd.f32 0.0, %v995
    %997 = vdwg.mxu0
    %v1000 = vunpack.c.l.b16 %v798
    %v1001 = vunpack.c.l.b16 %v799
    %v1002 = vpack.c.b16 %v1001, %v1000
    %v1005 = vunpack.c.l.b16 %v814
    %v1006 = vunpack.c.l.b16 %v815
    %v1007 = vpack.c.b16 %v1006, %v1005
    %v1009 = vsel %vm73, %v1002, 0
    %v1012 = vsel %vm77, %v1007, 0
    %1014 = vmatpush.bf16.msra.mxu0 0
    %1015 = vmatpush.bf16.msra.mxu0 0
    %1016 = vmatpush.bf16.msra.mxu0 0
    %1017 = vmatpush.bf16.msra.mxu0 0
    %1018 = vmatpush.bf16.msra.mxu0 0
    %1019 = vmatpush.bf16.msra.mxu0 0
    %1020 = vmatpush.bf16.msra.mxu0 0
    %1021 = vmatpush.bf16.msra.mxu0 %v1012
    %1022 = vmatmul.bf16.gmra.mxu0 %v1009
    %v1023 = vpop.f32.mrf.mxu0
    %v1024 = vadd.f32 0.0, %v1023
    %v1025 = vpop.f32.mrf.mxu0
    %v1026 = vadd.f32 0.0, %v1025
    %1027 = vdwg.mxu0
    %v1030 = vunpack.c.l.b16 %v800
    %v1031 = vunpack.c.l.b16 %v801
    %v1032 = vpack.c.b16 %v1031, %v1030
    %v1035 = vunpack.c.l.b16 %v816
    %v1036 = vunpack.c.l.b16 %v817
    %v1037 = vpack.c.b16 %v1036, %v1035
    %v1039 = vsel %vm73, %v1032, 0
    %v1042 = vsel %vm77, %v1037, 0
    %1044 = vmatpush.bf16.msra.mxu0 0
    %1045 = vmatpush.bf16.msra.mxu0 0
    %1046 = vmatpush.bf16.msra.mxu0 0
    %1047 = vmatpush.bf16.msra.mxu0 0
    %1048 = vmatpush.bf16.msra.mxu0 0
    %1049 = vmatpush.bf16.msra.mxu0 0
    %1050 = vmatpush.bf16.msra.mxu0 0
    %1051 = vmatpush.bf16.msra.mxu0 %v1042
    %1052 = vmatmul.bf16.gmra.mxu0 %v1039
    %v1053 = vpop.f32.mrf.mxu0
    %v1054 = vadd.f32 0.0, %v1053
    %v1055 = vpop.f32.mrf.mxu0
    %v1056 = vadd.f32 0.0, %v1055
    %1057 = vdwg.mxu0
    %v1058 = vrcp.pop %v740
    %v1059 = vrcp.pop %v743
    %v1060 = vrcp.pop %v746
    %v1061 = vrcp.pop %v749
    %v1062 = vrcp.pop %v752
    %v1063 = vrcp.pop %v755
    %v1064 = vrcp.pop %v758
    %v1065 = vrcp.pop %v761
    %v1066 = vrcp.pop %v764
    %v1067 = vrcp.pop %v767
    %v1068 = vrcp.pop %v770
    %v1069 = vrcp.pop %v773
    %v1070 = vrcp.pop %v776
    %v1071 = vrcp.pop %v779
    %v1072 = vrcp.pop %v782
    %v1073 = vrcp.pop %v785
    %v1074 = vmul.f32 %v844, %v1058
    %v1075 = vmul.f32 %v846, %v1059
    %v1076 = vmul.f32 %v874, %v1060
    %v1077 = vmul.f32 %v876, %v1061
    %v1078 = vmul.f32 %v904, %v1062
    %v1079 = vmul.f32 %v906, %v1063
    %v1080 = vmul.f32 %v934, %v1064
    %v1081 = vmul.f32 %v936, %v1065
    %v1082 = vmul.f32 %v964, %v1066
    %v1083 = vmul.f32 %v966, %v1067
    %v1084 = vmul.f32 %v994, %v1068
    %v1085 = vmul.f32 %v996, %v1069
    %v1086 = vmul.f32 %v1024, %v1070
    %v1087 = vmul.f32 %v1026, %v1071
    %v1088 = vmul.f32 %v1054, %v1072
    %v1089 = vmul.f32 %v1056, %v1073
    %v1090 = vld [vmem:[%s5] sm:$0x1]
    %v1091 = vld [vmem:[%s5 + $0x1] sm:$0x1]
    %v1092 = vld [vmem:[%s5 + $0x2] sm:$0x1]
    %v1093 = vld [vmem:[%s5 + $0x3] sm:$0x1]
    %v1094 = vld [vmem:[%s5 + $0x4] sm:$0x1]
    %v1095 = vld [vmem:[%s5 + $0x5] sm:$0x1]
    %v1096 = vld [vmem:[%s5 + $0x6] sm:$0x1]
    %v1097 = vld [vmem:[%s5 + $0x7] sm:$0x1]
    %v1106 = vperm.slane %v1090, 0
    %v1107 = vperm.slane %v1091, 0
    %v1108 = vperm.slane %v1092, 0
    %v1109 = vperm.slane %v1093, 0
    %v1110 = vperm.slane %v1094, 0
    %v1111 = vperm.slane %v1095, 0
    %v1112 = vperm.slane %v1096, 0
    %v1113 = vperm.slane %v1097, 0
    %v1122 = vadd.f32 %v1074, %v1106
    %v1123 = vadd.f32 %v1075, %v1106
    %v1124 = vadd.f32 %v1076, %v1107
    %v1125 = vadd.f32 %v1077, %v1107
    %v1126 = vadd.f32 %v1078, %v1108
    %v1127 = vadd.f32 %v1079, %v1108
    %v1128 = vadd.f32 %v1080, %v1109
    %v1129 = vadd.f32 %v1081, %v1109
    %v1130 = vadd.f32 %v1082, %v1110
    %v1131 = vadd.f32 %v1083, %v1110
    %v1132 = vadd.f32 %v1084, %v1111
    %v1133 = vadd.f32 %v1085, %v1111
    %v1134 = vadd.f32 %v1086, %v1112
    %v1135 = vadd.f32 %v1087, %v1112
    %v1136 = vadd.f32 %v1088, %v1113
    %v1137 = vadd.f32 %v1089, %v1113
    %vm1138 = vcmp.gt.f32.partialorder %v1122, 0.0
    %vm1139 = vcmp.gt.f32.partialorder %v1123, 0.0
    %vm1140 = vcmp.gt.f32.partialorder %v1124, 0.0
    %vm1141 = vcmp.gt.f32.partialorder %v1125, 0.0
    %vm1142 = vcmp.gt.f32.partialorder %v1126, 0.0
    %vm1143 = vcmp.gt.f32.partialorder %v1127, 0.0
    %vm1144 = vcmp.gt.f32.partialorder %v1128, 0.0
    %vm1145 = vcmp.gt.f32.partialorder %v1129, 0.0
    %vm1146 = vcmp.gt.f32.partialorder %v1130, 0.0
    %vm1147 = vcmp.gt.f32.partialorder %v1131, 0.0
    %vm1148 = vcmp.gt.f32.partialorder %v1132, 0.0
    %vm1149 = vcmp.gt.f32.partialorder %v1133, 0.0
    %vm1150 = vcmp.gt.f32.partialorder %v1134, 0.0
    %vm1151 = vcmp.gt.f32.partialorder %v1135, 0.0
    %vm1152 = vcmp.gt.f32.partialorder %v1136, 0.0
    %vm1153 = vcmp.gt.f32.partialorder %v1137, 0.0
    %v1154 = vmin.f32 %v1122, 0.0
    %v1155 = vmin.f32 %v1123, 0.0
    %v1156 = vmin.f32 %v1124, 0.0
    %v1157 = vmin.f32 %v1125, 0.0
    %v1158 = vmin.f32 %v1126, 0.0
    %v1159 = vmin.f32 %v1127, 0.0
    %v1160 = vmin.f32 %v1128, 0.0
    %v1161 = vmin.f32 %v1129, 0.0
    %v1162 = vmin.f32 %v1130, 0.0
    %v1163 = vmin.f32 %v1131, 0.0
    %v1164 = vmin.f32 %v1132, 0.0
    %v1165 = vmin.f32 %v1133, 0.0
    %v1166 = vmin.f32 %v1134, 0.0
    %v1167 = vmin.f32 %v1135, 0.0
    %v1168 = vmin.f32 %v1136, 0.0
    %v1169 = vmin.f32 %v1137, 0.0
    %v1170 = vmul.f32 %v1154, 1.442695
    %v1171 = vpow.pop %v1170
    %v1172 = vmul.f32 %v1155, 1.442695
    %v1173 = vpow.pop %v1172
    %v1174 = vmul.f32 %v1156, 1.442695
    %v1175 = vpow.pop %v1174
    %v1176 = vmul.f32 %v1157, 1.442695
    %v1177 = vpow.pop %v1176
    %v1178 = vmul.f32 %v1158, 1.442695
    %v1179 = vpow.pop %v1178
    %v1180 = vmul.f32 %v1159, 1.442695
    %v1181 = vpow.pop %v1180
    %v1182 = vmul.f32 %v1160, 1.442695
    %v1183 = vpow.pop %v1182
    %v1184 = vmul.f32 %v1161, 1.442695
    %v1185 = vpow.pop %v1184
    %v1186 = vmul.f32 %v1162, 1.442695
    %v1187 = vpow.pop %v1186
    %v1188 = vmul.f32 %v1163, 1.442695
    %v1189 = vpow.pop %v1188
    %v1190 = vmul.f32 %v1164, 1.442695
    %v1191 = vpow.pop %v1190
    %v1192 = vmul.f32 %v1165, 1.442695
    %v1193 = vpow.pop %v1192
    %v1194 = vmul.f32 %v1166, 1.442695
    %v1195 = vpow.pop %v1194
    %v1196 = vmul.f32 %v1167, 1.442695
    %v1197 = vpow.pop %v1196
    %v1198 = vmul.f32 %v1168, 1.442695
    %v1199 = vpow.pop %v1198
    %v1200 = vmul.f32 %v1169, 1.442695
    %v1201 = vpow.pop %v1200
    %v1202 = vsub.f32 %v1171, 1.0
    %v1203 = vsub.f32 %v1173, 1.0
    %v1204 = vsub.f32 %v1175, 1.0
    %v1205 = vsub.f32 %v1177, 1.0
    %v1206 = vsub.f32 %v1179, 1.0
    %v1207 = vsub.f32 %v1181, 1.0
    %v1208 = vsub.f32 %v1183, 1.0
    %v1209 = vsub.f32 %v1185, 1.0
    %v1210 = vsub.f32 %v1187, 1.0
    %v1211 = vsub.f32 %v1189, 1.0
    %v1212 = vsub.f32 %v1191, 1.0
    %v1213 = vsub.f32 %v1193, 1.0
    %v1214 = vsub.f32 %v1195, 1.0
    %v1215 = vsub.f32 %v1197, 1.0
    %v1216 = vsub.f32 %v1199, 1.0
    %v1217 = vsub.f32 %v1201, 1.0
    %v1218 = vsel %vm1138, %v1122, %v1202
    %v1219 = vsel %vm1139, %v1123, %v1203
    %v1220 = vsel %vm1140, %v1124, %v1204
    %v1221 = vsel %vm1141, %v1125, %v1205
    %v1222 = vsel %vm1142, %v1126, %v1206
    %v1223 = vsel %vm1143, %v1127, %v1207
    %v1224 = vsel %vm1144, %v1128, %v1208
    %v1225 = vsel %vm1145, %v1129, %v1209
    %v1226 = vsel %vm1146, %v1130, %v1210
    %v1227 = vsel %vm1147, %v1131, %v1211
    %v1228 = vsel %vm1148, %v1132, %v1212
    %v1229 = vsel %vm1149, %v1133, %v1213
    %v1230 = vsel %vm1150, %v1134, %v1214
    %v1231 = vsel %vm1151, %v1135, %v1215
    %v1232 = vsel %vm1152, %v1136, %v1216
    %v1233 = vsel %vm1153, %v1137, %v1217
    %v1234 = vpack.c.bf16 %v1218, %v1218
    %v1235 = vpack.c.bf16 %v1219, %v1219
    %v1236 = vpack.c.bf16 %v1220, %v1220
    %v1237 = vpack.c.bf16 %v1221, %v1221
    %v1238 = vpack.c.bf16 %v1222, %v1222
    %v1239 = vpack.c.bf16 %v1223, %v1223
    %v1240 = vpack.c.bf16 %v1224, %v1224
    %v1241 = vpack.c.bf16 %v1225, %v1225
    %v1242 = vpack.c.bf16 %v1226, %v1226
    %v1243 = vpack.c.bf16 %v1227, %v1227
    %v1244 = vpack.c.bf16 %v1228, %v1228
    %v1245 = vpack.c.bf16 %v1229, %v1229
    %v1246 = vpack.c.bf16 %v1230, %v1230
    %v1247 = vpack.c.bf16 %v1231, %v1231
    %v1248 = vpack.c.bf16 %v1232, %v1232
    %v1249 = vpack.c.bf16 %v1233, %v1233
    %v1250 = vld [vmem:[%s6] sm:$0xf]
    %v1251 = vld [vmem:[%s6 + $0x4] sm:$0xf]
    %v1252 = vld [vmem:[%s6 + $0x8] sm:$0xf]
    %v1253 = vld [vmem:[%s6 + $0xc] sm:$0xf]
    %v1254 = vld [vmem:[%s6 + $0x10] sm:$0xf]
    %v1255 = vld [vmem:[%s6 + $0x14] sm:$0xf]
    %v1256 = vld [vmem:[%s6 + $0x18] sm:$0xf]
    %v1257 = vld [vmem:[%s6 + $0x1c] sm:$0xf]
    %v1260 = vunpack.c.l.b16 %v1234
    %v1261 = vunpack.c.l.b16 %v1235
    %v1262 = vpack.c.b16 %v1261, %v1260
    %v1264 = vsel %vm297, %v1262, 0
    %vm1266 = vcmask 1043456
    %v1268 = vsel %vm1266, %v1250, 0
    %1270 = vmatpush.bf16.msra.mxu0 0
    %1271 = vmatpush.bf16.msra.mxu0 0
    %1272 = vmatpush.bf16.msra.mxu0 0
    %1273 = vmatpush.bf16.msra.mxu0 0
    %1274 = vmatpush.bf16.msra.mxu0 0
    %1275 = vmatpush.bf16.msra.mxu0 0
    %1276 = vmatpush.bf16.msra.mxu0 0
    %1277 = vmatpush.bf16.msra.mxu0 %v1268
    %1278 = vmatmul.bf16.gmra.mxu0 %v1264
    %v1279 = vpop.f32.mrf.mxu0
    %v1280 = vadd.f32 0.0, %v1279
    %v1281 = vpop.f32.mrf.mxu0
    %v1282 = vadd.f32 0.0, %v1281
    %1283 = vdwg.mxu0
    %v1286 = vunpack.c.l.b16 %v1236
    %v1287 = vunpack.c.l.b16 %v1237
    %v1288 = vpack.c.b16 %v1287, %v1286
    %v1290 = vsel %vm297, %v1288, 0
    %v1293 = vsel %vm1266, %v1251, 0
    %1295 = vmatpush.bf16.msra.mxu0 0
    %1296 = vmatpush.bf16.msra.mxu0 0
    %1297 = vmatpush.bf16.msra.mxu0 0
    %1298 = vmatpush.bf16.msra.mxu0 0
    %1299 = vmatpush.bf16.msra.mxu0 0
    %1300 = vmatpush.bf16.msra.mxu0 0
    %1301 = vmatpush.bf16.msra.mxu0 0
    %1302 = vmatpush.bf16.msra.mxu0 %v1293
    %1303 = vmatmul.bf16.gmra.mxu0 %v1290
    %v1304 = vpop.f32.mrf.mxu0
    %v1305 = vadd.f32 0.0, %v1304
    %v1306 = vpop.f32.mrf.mxu0
    %v1307 = vadd.f32 0.0, %v1306
    %1308 = vdwg.mxu0
    %v1311 = vunpack.c.l.b16 %v1238
    %v1312 = vunpack.c.l.b16 %v1239
    %v1313 = vpack.c.b16 %v1312, %v1311
    %v1315 = vsel %vm297, %v1313, 0
    %v1318 = vsel %vm1266, %v1252, 0
    %1320 = vmatpush.bf16.msra.mxu0 0
    %1321 = vmatpush.bf16.msra.mxu0 0
    %1322 = vmatpush.bf16.msra.mxu0 0
    %1323 = vmatpush.bf16.msra.mxu0 0
    %1324 = vmatpush.bf16.msra.mxu0 0
    %1325 = vmatpush.bf16.msra.mxu0 0
    %1326 = vmatpush.bf16.msra.mxu0 0
    %1327 = vmatpush.bf16.msra.mxu0 %v1318
    %1328 = vmatmul.bf16.gmra.mxu0 %v1315
    %v1329 = vpop.f32.mrf.mxu0
    %v1330 = vadd.f32 0.0, %v1329
    %v1331 = vpop.f32.mrf.mxu0
    %v1332 = vadd.f32 0.0, %v1331
    %1333 = vdwg.mxu0
    %v1336 = vunpack.c.l.b16 %v1240
    %v1337 = vunpack.c.l.b16 %v1241
    %v1338 = vpack.c.b16 %v1337, %v1336
    %v1340 = vsel %vm297, %v1338, 0
    %v1343 = vsel %vm1266, %v1253, 0
    %1345 = vmatpush.bf16.msra.mxu0 0
    %1346 = vmatpush.bf16.msra.mxu0 0
    %1347 = vmatpush.bf16.msra.mxu0 0
    %1348 = vmatpush.bf16.msra.mxu0 0
    %1349 = vmatpush.bf16.msra.mxu0 0
    %1350 = vmatpush.bf16.msra.mxu0 0
    %1351 = vmatpush.bf16.msra.mxu0 0
    %1352 = vmatpush.bf16.msra.mxu0 %v1343
    %1353 = vmatmul.bf16.gmra.mxu0 %v1340
    %v1354 = vpop.f32.mrf.mxu0
    %v1355 = vadd.f32 0.0, %v1354
    %v1356 = vpop.f32.mrf.mxu0
    %v1357 = vadd.f32 0.0, %v1356
    %1358 = vdwg.mxu0
    %v1361 = vunpack.c.l.b16 %v1242
    %v1362 = vunpack.c.l.b16 %v1243
    %v1363 = vpack.c.b16 %v1362, %v1361
    %v1365 = vsel %vm297, %v1363, 0
    %v1368 = vsel %vm1266, %v1254, 0
    %1370 = vmatpush.bf16.msra.mxu0 0
    %1371 = vmatpush.bf16.msra.mxu0 0
    %1372 = vmatpush.bf16.msra.mxu0 0
    %1373 = vmatpush.bf16.msra.mxu0 0
    %1374 = vmatpush.bf16.msra.mxu0 0
    %1375 = vmatpush.bf16.msra.mxu0 0
    %1376 = vmatpush.bf16.msra.mxu0 0
    %1377 = vmatpush.bf16.msra.mxu0 %v1368
    %1378 = vmatmul.bf16.gmra.mxu0 %v1365
    %v1379 = vpop.f32.mrf.mxu0
    %v1380 = vadd.f32 0.0, %v1379
    %v1381 = vpop.f32.mrf.mxu0
    %v1382 = vadd.f32 0.0, %v1381
    %1383 = vdwg.mxu0
    %v1386 = vunpack.c.l.b16 %v1244
    %v1387 = vunpack.c.l.b16 %v1245
    %v1388 = vpack.c.b16 %v1387, %v1386
    %v1390 = vsel %vm297, %v1388, 0
    %v1393 = vsel %vm1266, %v1255, 0
    %1395 = vmatpush.bf16.msra.mxu0 0
    %1396 = vmatpush.bf16.msra.mxu0 0
    %1397 = vmatpush.bf16.msra.mxu0 0
    %1398 = vmatpush.bf16.msra.mxu0 0
    %1399 = vmatpush.bf16.msra.mxu0 0
    %1400 = vmatpush.bf16.msra.mxu0 0
    %1401 = vmatpush.bf16.msra.mxu0 0
    %1402 = vmatpush.bf16.msra.mxu0 %v1393
    %1403 = vmatmul.bf16.gmra.mxu0 %v1390
    %v1404 = vpop.f32.mrf.mxu0
    %v1405 = vadd.f32 0.0, %v1404
    %v1406 = vpop.f32.mrf.mxu0
    %v1407 = vadd.f32 0.0, %v1406
    %1408 = vdwg.mxu0
    %v1411 = vunpack.c.l.b16 %v1246
    %v1412 = vunpack.c.l.b16 %v1247
    %v1413 = vpack.c.b16 %v1412, %v1411
    %v1415 = vsel %vm297, %v1413, 0
    %v1418 = vsel %vm1266, %v1256, 0
    %1420 = vmatpush.bf16.msra.mxu0 0
    %1421 = vmatpush.bf16.msra.mxu0 0
    %1422 = vmatpush.bf16.msra.mxu0 0
    %1423 = vmatpush.bf16.msra.mxu0 0
    %1424 = vmatpush.bf16.msra.mxu0 0
    %1425 = vmatpush.bf16.msra.mxu0 0
    %1426 = vmatpush.bf16.msra.mxu0 0
    %1427 = vmatpush.bf16.msra.mxu0 %v1418
    %1428 = vmatmul.bf16.gmra.mxu0 %v1415
    %v1429 = vpop.f32.mrf.mxu0
    %v1430 = vadd.f32 0.0, %v1429
    %v1431 = vpop.f32.mrf.mxu0
    %v1432 = vadd.f32 0.0, %v1431
    %1433 = vdwg.mxu0
    %v1436 = vunpack.c.l.b16 %v1248
    %v1437 = vunpack.c.l.b16 %v1249
    %v1438 = vpack.c.b16 %v1437, %v1436
    %v1440 = vsel %vm297, %v1438, 0
    %v1443 = vsel %vm1266, %v1257, 0
    %1445 = vmatpush.bf16.msra.mxu0 0
    %1446 = vmatpush.bf16.msra.mxu0 0
    %1447 = vmatpush.bf16.msra.mxu0 0
    %1448 = vmatpush.bf16.msra.mxu0 0
    %1449 = vmatpush.bf16.msra.mxu0 0
    %1450 = vmatpush.bf16.msra.mxu0 0
    %1451 = vmatpush.bf16.msra.mxu0 0
    %1452 = vmatpush.bf16.msra.mxu0 %v1443
    %1453 = vmatmul.bf16.gmra.mxu0 %v1440
    %v1454 = vpop.f32.mrf.mxu0
    %v1455 = vadd.f32 0.0, %v1454
    %v1456 = vpop.f32.mrf.mxu0
    %v1457 = vadd.f32 0.0, %v1456
    %1458 = vdwg.mxu0
    %v1459 = vadd.f32 %v1280, %v1305
    %v1460 = vadd.f32 %v1459, %v1330
    %v1461 = vadd.f32 %v1460, %v1355
    %v1462 = vadd.f32 %v1461, %v1380
    %v1463 = vadd.f32 %v1462, %v1405
    %v1464 = vadd.f32 %v1463, %v1430
    %v1465 = vadd.f32 %v1464, %v1455
    %vm1466 = vcmask 1041408
    %v1467 = vsel %vm1466, %v1282, 0.0
    %v1468 = vsel %vm1466, %v1307, 0.0
    %v1469 = vadd.f32 %v1467, %v1468
    %v1470 = vsel %vm1466, %v1332, 0.0
    %v1471 = vadd.f32 %v1469, %v1470
    %v1472 = vsel %vm1466, %v1357, 0.0
    %v1473 = vadd.f32 %v1471, %v1472
    %v1474 = vsel %vm1466, %v1382, 0.0
    %v1475 = vadd.f32 %v1473, %v1474
    %v1476 = vsel %vm1466, %v1407, 0.0
    %v1477 = vadd.f32 %v1475, %v1476
    %v1478 = vsel %vm1466, %v1432, 0.0
    %v1479 = vadd.f32 %v1477, %v1478
    %v1480 = vsel %vm1466, %v1457, 0.0
    %v1481 = vadd.f32 %v1479, %v1480
    %v1482 = vld [vmem:[%s8] sm:$0x1]
    %v1484 = vperm.slane %v1482, 0
    %v1486 = vmul.f32 %v1465, %v1484
    %v1487 = vmul.f32 %v1481, %v1484
    %1488 = vadd.xlane.f32.xlu0 %v1486
    %v1489 = vpop.xlane.xlu0 %1488
    %v1490 = vsel %vm1466, %v1487, 0.0
    %1491 = vadd.xlane.f32.xlu0 %v1490
    %v1492 = vpop.xlane.xlu0 %1491
    %v1493 = vld [vmem:[%s7] sm:$0x1]
    %v1495 = vperm.slane %v1493, 0
    %v1497 = vmul.f32 %v1465, %v1495
    %v1498 = vmul.f32 %v1481, %v1495
    %1499 = vadd.xlane.f32.xlu0 %v1497
    %v1500 = vpop.xlane.xlu0 %1499
    %v1501 = vsel %vm1466, %v1498, 0.0
    %1502 = vadd.xlane.f32.xlu0 %v1501
    %v1503 = vpop.xlane.xlu0 %1502
    %1504 = vxpose.xlu0.b32.start [1/16] %v1500, 128
    %1505 = vxpose.xlu0.b32.cont [2/16] %v1503, 128
    %1506 = vxpose.xlu0.b32.cont [3/16] 0.0, 128
    %1507 = vxpose.xlu0.b32.cont [4/16] 0.0, 128
    %1508 = vxpose.xlu0.b32.cont [5/16] 0.0, 128
    %1509 = vxpose.xlu0.b32.cont [6/16] 0.0, 128
    %1510 = vxpose.xlu0.b32.cont [7/16] 0.0, 128
    %1511 = vxpose.xlu0.b32.cont [8/16] 0.0, 128
    %1512 = vxpose.xlu0.b32.cont [9/16] 0.0, 128
    %1513 = vxpose.xlu0.b32.cont [10/16] 0.0, 128
    %1514 = vxpose.xlu0.b32.cont [11/16] 0.0, 128
    %1515 = vxpose.xlu0.b32.cont [12/16] 0.0, 128
    %1516 = vxpose.xlu0.b32.cont [13/16] 0.0, 128
    %1517 = vxpose.xlu0.b32.cont [14/16] 0.0, 128
    %1518 = vxpose.xlu0.b32.cont [15/16] 0.0, 128
    %1519 = vxpose.xlu0.b32.end [16/16] 0.0, 128
    %v1520 = vpop.trf.xlu0
    %v1521 = vpop.trf.xlu0
    %v1522 = vpop.trf.xlu0
    %v1523 = vpop.trf.xlu0
    %v1524 = vpop.trf.xlu0
    %v1525 = vpop.trf.xlu0
    %v1526 = vpop.trf.xlu0
    %v1527 = vpop.trf.xlu0
    %v1528 = vpop.trf.xlu0
    %v1529 = vpop.trf.xlu0
    %v1530 = vpop.trf.xlu0
    %v1531 = vpop.trf.xlu0
    %v1532 = vpop.trf.xlu0
    %v1533 = vpop.trf.xlu0
    %v1534 = vpop.trf.xlu0
    %v1535 = vpop.trf.xlu0
    %v1536 = vperm.slane %v1520, 0
    %v1537 = vadd.f32 %v1489, %v1536
    %v1538 = vadd.f32 %v1492, %v1536
    %vm1539 = vcmp.ge.f32.partialorder %v1537, 0.0
    %vm1540 = vcmp.ge.f32.partialorder %v1538, 0.0
    %v1541 = vmul.f32 %v1537, 0.2
    %v1542 = vmul.f32 %v1538, 0.2
    %v1543 = vsel %vm1539, %v1537, %v1541
    %v1544 = vsel %vm1540, %v1538, %v1542
    %v1545 = vsel %vm43, %v1543, -1e+30
    %v1546 = vsel %vm44, %v1544, -1e+30
    %v1547 = vsel %vm73, %v1545, -inf
    %1548 = vmax.xlane.f32.xlu0 %v1547
    %v1549 = vpop.xlane.xlu0 %1548
    %v1550 = vsel %vm644, %v1546, -inf
    %1551 = vmax.xlane.f32.xlu0 %v1550
    %v1552 = vpop.xlane.xlu0 %1551
    %v1553 = vsub.f32 %v1545, %v1549
    %v1554 = vsub.f32 %v1546, %v1552
    %v1555 = vmul.f32 %v1553, 1.442695
    %v1556 = vpow.pop %v1555
    %v1557 = vmul.f32 %v1554, 1.442695
    %v1558 = vpow.pop %v1557
    %v1559 = vsel %vm73, %v1556, 0.0
    %1560 = vadd.xlane.f32.xlu0 %v1559
    %v1561 = vpop.xlane.xlu0 %1560
    %v1562 = vsel %vm644, %v1558, 0.0
    %1563 = vadd.xlane.f32.xlu0 %v1562
    %v1564 = vpop.xlane.xlu0 %1563
    %v1565 = vpack.c.bf16 %v1558, %v1556
    %v1566 = vpack.c.bf16 %v1481, %v1465
    %v1568 = vsel %vm73, %v1565, 0
    %v1571 = vsel %vm77, %v1566, 0
    %1573 = vmatpush.bf16.msra.mxu0 0
    %1574 = vmatpush.bf16.msra.mxu0 0
    %1575 = vmatpush.bf16.msra.mxu0 0
    %1576 = vmatpush.bf16.msra.mxu0 0
    %1577 = vmatpush.bf16.msra.mxu0 0
    %1578 = vmatpush.bf16.msra.mxu0 0
    %1579 = vmatpush.bf16.msra.mxu0 0
    %1580 = vmatpush.bf16.msra.mxu0 %v1571
    %1581 = vmatmul.bf16.gmra.mxu0 %v1568
    %v1582 = vpop.f32.mrf.mxu0
    %v1583 = vadd.f32 0.0, %v1582
    %v1584 = vpop.f32.mrf.mxu0
    %v1585 = vadd.f32 0.0, %v1584
    %1586 = vdwg.mxu0
    %v1587 = vrcp.pop %v1561
    %v1588 = vrcp.pop %v1564
    %v1589 = vmul.f32 %v1583, %v1587
    %v1590 = vmul.f32 %v1585, %v1588
    %v1591 = vld [vmem:[%s9] sm:$0x1]
    %v1593 = vperm.slane %v1591, 0
    %v1595 = vadd.f32 %v1589, %v1593
    %v1596 = vadd.f32 %v1590, %v1593
    %1597 = vst [vmem:[#allocation2] sm:$0xff] %v1595
    %1598 = vst [vmem:[#allocation2 + $0x8] sm:$0x3] %v1596
    // Predicated region
    $region42: #{gat_forward.1} parent=1 // pred_check
      _
    $region43: #{gat_forward.1} parent=1 // pred_check_branch
      %1600 = sbr.rel (0) target = $region45
    $region44: #{gat_forward.1} parent=1 // pred_region
      %1602 = vsyncadd [#allocation3], 0
      %s1603 = sshll.u32 [#allocation2], 4
      %s1604 = int_to_ptr.vmem [resolvable:$true] %s1603
      %s1605 = sshll.u32 %s10, 4
      %s1606 = int_to_ptr.hbm [resolvable:$true] %s1605
      %1611 = dma.vmem_to_hbm [thread:$0]  %s1604, 256, %s1606, [#allocation3], 128, 128, 8
    $region45: #{gat_forward.1} parent=1 // pred_fallthru
      _
    // Predicated region
    $region46: #{gat_forward.1} parent=1 // pred_check
      _
    $region47: #{gat_forward.1} parent=1 // pred_check_branch
      %1613 = sbr.rel (0) target = $region49
    $region48: #{gat_forward.1} parent=1 // pred_region
      %1615 = dma.done [#allocation3], 256
    $region49: #{gat_forward.1} parent=1 // pred_fallthru
      _
    %1616 = vsyncpa [#allocation3], 1

</llo_original>
